<compile_context>
chip_gen: v5e
topology: v5e:2x2
jax: 0.10.0
libtpu: 0.0.40
codegen_flags: <defaults>
</compile_context>

<pallas_src>
import functools

import jax
import jax.numpy as jnp
from jax import lax
from jax.experimental import pallas as pl
from jax.experimental.pallas import tpu as pltpu


def _resblock_kernel(x_ref, t1_ref, b1_ref, g1_ref, bb1_ref,
                     t2_ref, b2_ref, g2_ref, bb2_ref,
                     sel_ref, selt_ref, o_ref, pad_ref, *, eps):
    n, h, wc = x_ref.shape           # x is (N, H, W*C), lane-dense
    c = sel_ref.shape[1]
    w = wc // c
    k = t1_ref.shape[0]
    p = (k - 1) // 2
    nh = n * h
    inv_m = 1.0 / float(n * h * w)   # BatchNorm divisor (biased variance)

    # Zero only the 2p halo rows, once per call; the interior rows are fully
    # overwritten before each conv (no full pad-buffer zero-fill).
    pad_ref[:, :p, :] = jnp.zeros((n, p, wc), pad_ref.dtype)
    pad_ref[:, p + h:, :] = jnp.zeros((n, p, wc), pad_ref.dtype)

    def conv_relu(src, t_ref, b_ref):
        # src: (n, h, w*c) f32 values.  'same' conv = k lane-dense bf16 MXU
        # matmuls (nh, w*c) @ (w*c, w*c); W padding lives inside the banded
        # weights, H padding in the scratch halo rows.
        pad_ref[:, p:p + h, :] = src
        acc = jnp.zeros((nh, wc), jnp.float32)
        for dy in range(k):          # k is small and static -> unrolled
            slab = pad_ref[:, dy:dy + h, :].reshape(nh, wc).astype(jnp.bfloat16)
            acc = acc + jnp.dot(slab, t_ref[dy],
                                preferred_element_type=jnp.float32)
        return jnp.maximum(acc + b_ref[...], 0.0)        # conv bias + ReLU

    def batchnorm(y, g_ref, beta_ref):
        # One traversal for the stats, one fused FMA pass to apply them.
        # The (1,wc)@(wc,c) fold and (1,c)@(c,wc) broadcast dots are negligible
        # MXU work; HIGHEST keeps the statistics effectively f32.
        hi = lax.Precision.HIGHEST
        s1 = jnp.dot(jnp.sum(y, axis=0, keepdims=True), sel_ref[...],
                     preferred_element_type=jnp.float32, precision=hi)
        s2 = jnp.dot(jnp.sum(y * y, axis=0, keepdims=True), sel_ref[...],
                     preferred_element_type=jnp.float32, precision=hi)
        mean_c = s1 * inv_m                              # (1, c)
        var_c = s2 * inv_m - mean_c * mean_c             # biased variance
        inv_c = lax.rsqrt(var_c + eps)
        mean_l = jnp.dot(mean_c, selt_ref[...],
                         preferred_element_type=jnp.float32, precision=hi)
        inv_l = jnp.dot(inv_c, selt_ref[...],
                        preferred_element_type=jnp.float32, precision=hi)
        scale_l = g_ref[...] * inv_l                     # (1, w*c)
        shift_l = beta_ref[...] - mean_l * scale_l       # (1, w*c)
        return y * scale_l + shift_l                     # single FMA pass

    y = batchnorm(conv_relu(x_ref[...], t1_ref, b1_ref), g1_ref, bb1_ref)
    y = batchnorm(conv_relu(y.reshape(n, h, wc), t2_ref, b2_ref),
                  g2_ref, bb2_ref)
    # Residual: re-read x_ref here rather than holding an f32 copy live above.
    out = jnp.maximum(y + x_ref[...].reshape(nh, wc), 0.0)
    o_ref[...] = out.astype(o_ref.dtype)                 # 128-lane-dense store


def _banded_conv_weights(w_hwio, width):
    """(K, K, Cin, Cout) HWIO conv weights -> (K, W*Cin, W*Cout) bf16 matrices.

    T[dy, xs*Cin + ci, x*Cout + co] = w[dy, xs - x + p, ci, co] when
    |xs - x| <= p and 0 otherwise, so the W-direction 'same' convolution for a
    fixed dy tap becomes one lane-dense matmul with the zero padding absorbed
    into the band structure.
    """
    kh, kw, cin, cout = w_hwio.shape
    p = (kw - 1) // 2
    xs = jnp.arange(width)[:, None]          # source column
    x = jnp.arange(width)[None, :]           # output column
    dx = xs - x + p                          # tap index along W
    valid = (dx >= 0) & (dx < kw)
    t = w_hwio[:, jnp.clip(dx, 0, kw - 1)]   # (kh, W, W, Cin, Cout)
    t = jnp.where(valid[None, :, :, None, None], t, 0.0)
    t = jnp.transpose(t, (0, 1, 3, 2, 4)).reshape(kh, width * cin, width * cout)
    return t.astype(jnp.bfloat16)


def resblock_forward(x_nchw, params, eps=1e-3):
    w1, b1, g1, beta1, w2, b2, g2, beta2 = params
    n, c, h, w = x_nchw.shape
    k = w1.shape[0]
    assert k % 2 == 1, "'same' padding implemented for odd kernel sizes"
    p = (k - 1) // 2
    wc = w * c

    # NCHW -> lane-dense (N, H, W*C).  Kept only for the PyTorch boundary.
    x_lane = jnp.transpose(x_nchw, (0, 2, 3, 1)).reshape(n, h, wc)

    t1 = _banded_conv_weights(w1, w)
    t2 = _banded_conv_weights(w2, w)

    def lanes(v):  # per-channel (1, C) vector -> per-lane (1, W*C) vector
        return jnp.tile(v.reshape(1, c).astype(jnp.float32), (1, w))

    sel = jnp.tile(jnp.eye(c, dtype=jnp.float32), (w, 1))   # (W*C, C) fold
    selt = sel.T                                            # (C, W*C) expand

    vmem = pl.BlockSpec(memory_space=pltpu.MemorySpace.VMEM)
    kernel = functools.partial(_resblock_kernel, eps=eps)

    out = pl.pallas_call(
        kernel,
        out_shape=jax.ShapeDtypeStruct((n * h, wc), x_lane.dtype),
        in_specs=[vmem] * 11,
        out_specs=vmem,
        scratch_shapes=[pltpu.VMEM((n, h + 2 * p, wc), jnp.float32)],
        compiler_params=pltpu.CompilerParams(
            vmem_limit_bytes=32 * 1024 * 1024),
    )(x_lane, t1, lanes(b1), lanes(g1), lanes(beta1),
      t2, lanes(b2), lanes(g2), lanes(beta2), sel, selt)

    return jnp.transpose(out.reshape(n, h, w, c), (0, 3, 1, 2))  # -> NCHW


def resblock_reference(x_nchw, params, eps=1e-3):
    # Pure-JAX reference (f32, HIGHEST-precision XLA conv) for a sanity check.
    w1, b1, g1, beta1, w2, b2, g2, beta2 = params
    x = jnp.transpose(x_nchw, (0, 2, 3, 1)).astype(jnp.float32)

    def conv(y, w, b):
        out = lax.conv_general_dilated(
            y, w, window_strides=(1, 1), padding="SAME",
            dimension_numbers=("NHWC", "HWIO", "NHWC"),
            precision=lax.Precision.HIGHEST)
        return out + b.reshape(1, 1, 1, -1)

    def bn(y, g, beta):
        mean = jnp.mean(y, axis=(0, 1, 2), keepdims=True)
        var = jnp.mean((y - mean) ** 2, axis=(0, 1, 2), keepdims=True)
        return ((y - mean) * lax.rsqrt(var + eps) * g.reshape(1, 1, 1, -1)
                + beta.reshape(1, 1, 1, -1))

    y = jax.nn.relu(conv(x, w1, b1))
    y = bn(y, g1, beta1)
    y = jax.nn.relu(conv(y, w2, b2))
    y = bn(y, g2, beta2)
    y = jax.nn.relu(y + x)
    return jnp.transpose(y, (0, 3, 1, 2))


if __name__ == "__main__":
    n_filters = 8
    kernel_size = 3
    N, H, W = 2, 16, 16

    key = jax.random.PRNGKey(0)
    kx, kw1, kb1, kw2, kb2, kg1, kbt1, kg2, kbt2 = jax.random.split(key, 9)

    x = jax.random.normal(kx, (N, n_filters, H, W), dtype=jnp.float32)  # NCHW

    fan_in = n_filters * kernel_size * kernel_size
    scale = 1.0 / jnp.sqrt(jnp.float32(fan_in))
    # Conv weights kept in HWIO (kh, kw, Cin, Cout); equivalent to PyTorch's
    # (Cout, Cin, kh, kw) transposed.
    w1 = scale * jax.random.normal(
        kw1, (kernel_size, kernel_size, n_filters, n_filters), jnp.float32)
    b1 = scale * jax.random.normal(kb1, (1, n_filters), jnp.float32)
    w2 = scale * jax.random.normal(
        kw2, (kernel_size, kernel_size, n_filters, n_filters), jnp.float32)
    b2 = scale * jax.random.normal(kb2, (1, n_filters), jnp.float32)
    # BatchNorm affine params (perturbed from gamma=1, beta=0 to exercise math).
    g1 = 1.0 + 0.1 * jax.random.normal(kg1, (1, n_filters), jnp.float32)
    beta1 = 0.1 * jax.random.normal(kbt1, (1, n_filters), jnp.float32)
    g2 = 1.0 + 0.1 * jax.random.normal(kg2, (1, n_filters), jnp.float32)
    beta2 = 0.1 * jax.random.normal(kbt2, (1, n_filters), jnp.float32)

    params = (w1, b1, g1, beta1, w2, b2, g2, beta2)

    out = jax.block_until_ready(resblock_forward(x, params))
    ref = jax.block_until_ready(resblock_reference(x, params))

    assert out.shape == x.shape and out.dtype == x.dtype
    # Tolerance sized for bf16 conv matmuls (f32 accumulation) vs the f32
    # HIGHEST-precision reference; structural bugs would be orders larger.
    assert bool(jnp.allclose(out, ref, atol=5e-2, rtol=2e-2)), \
        "mismatch vs reference"
    print("KERNEL_OK")
</pallas_src>

<mosaic_0001>
module attributes {stable_mosaic.version = 11 : i64} {
  func.func @_resblock_kernel(%arg0: memref<2x16x128xf32, #tpu.memory_space<vmem>>, %arg1: memref<3x128x128xbf16, #tpu.memory_space<vmem>>, %arg2: memref<1x128xf32, #tpu.memory_space<vmem>>, %arg3: memref<1x128xf32, #tpu.memory_space<vmem>>, %arg4: memref<1x128xf32, #tpu.memory_space<vmem>>, %arg5: memref<3x128x128xbf16, #tpu.memory_space<vmem>>, %arg6: memref<1x128xf32, #tpu.memory_space<vmem>>, %arg7: memref<1x128xf32, #tpu.memory_space<vmem>>, %arg8: memref<1x128xf32, #tpu.memory_space<vmem>>, %arg9: memref<128x8xf32, #tpu.memory_space<vmem>>, %arg10: memref<8x128xf32, #tpu.memory_space<vmem>>, %arg11: memref<32x128xf32, #tpu.memory_space<vmem>>, %arg12: memref<2x18x128xf32, #tpu.memory_space<vmem>>) attributes {dimension_semantics = [], scalar_prefetch = 0 : i64, scratch_operands = 1 : i64, tpu.core_type = #tpu.core_type<tc>} {
    %cst = arith.constant 0.000000e+00 : f32
    %0 = vector.broadcast %cst : f32 to vector<2x1x128xf32>
    %c0 = arith.constant 0 : index
    %c0_0 = arith.constant 0 : index
    %c0_1 = arith.constant 0 : index
    %1 = vector.load %arg12[%c0, %c0_0, %c0_1] : memref<2x18x128xf32, #tpu.memory_space<vmem>>, vector<2x1x128xf32>
    tpu.vector_store %arg12[%c0, %c0_0, %c0_1], %0 {strides = array<i32>} : memref<2x18x128xf32, #tpu.memory_space<vmem>>, vector<2x1x128xf32>,
    %cst_2 = arith.constant 0.000000e+00 : f32
    %2 = vector.broadcast %cst_2 : f32 to vector<2x1x128xf32>
    %c0_3 = arith.constant 0 : index
    %c17 = arith.constant 17 : index
    %c0_4 = arith.constant 0 : index
    %3 = vector.load %arg12[%c0_3, %c17, %c0_4] : memref<2x18x128xf32, #tpu.memory_space<vmem>>, vector<2x1x128xf32>
    tpu.vector_store %arg12[%c0_3, %c17, %c0_4], %2 {strides = array<i32>} : memref<2x18x128xf32, #tpu.memory_space<vmem>>, vector<2x1x128xf32>,
    %c0_5 = arith.constant 0 : index
    %c0_6 = arith.constant 0 : index
    %c0_7 = arith.constant 0 : index
    %4 = vector.load %arg0[%c0_5, %c0_6, %c0_7] : memref<2x16x128xf32, #tpu.memory_space<vmem>>, vector<2x16x128xf32>
    %c0_8 = arith.constant 0 : index
    %c1 = arith.constant 1 : index
    %c0_9 = arith.constant 0 : index
    %5 = vector.load %arg12[%c0_8, %c1, %c0_9] : memref<2x18x128xf32, #tpu.memory_space<vmem>>, vector<2x16x128xf32>
    tpu.vector_store %arg12[%c0_8, %c1, %c0_9], %4 {strides = array<i32>} : memref<2x18x128xf32, #tpu.memory_space<vmem>>, vector<2x16x128xf32>,
    %cst_10 = arith.constant 0.000000e+00 : f32
    %6 = vector.broadcast %cst_10 : f32 to vector<32x128xf32>
    %c0_11 = arith.constant 0 : index
    %c0_12 = arith.constant 0 : index
    %c0_13 = arith.constant 0 : index
    %7 = vector.load %arg12[%c0_11, %c0_12, %c0_13] : memref<2x18x128xf32, #tpu.memory_space<vmem>>, vector<2x16x128xf32>
    %8 = vector.shape_cast %7 : vector<2x16x128xf32> to vector<32x128xf32>
    %9 = arith.truncf %8 : vector<32x128xf32> to vector<32x128xbf16>
    %c0_14 = arith.constant 0 : index
    %c0_15 = arith.constant 0 : index
    %c0_16 = arith.constant 0 : index
    %10 = vector.load %arg1[%c0_14, %c0_15, %c0_16] : memref<3x128x128xbf16, #tpu.memory_space<vmem>>, vector<1x128x128xbf16>
    %11 = vector.shape_cast %10 : vector<1x128x128xbf16> to vector<128x128xbf16>
    %cst_17 = arith.constant dense<0.000000e+00> : vector<32x128xf32>
    %12 = tpu.matmul %9, %11, %cst_17 {dimension_numbers = #tpu.dot_dimension_numbers<[1], [0], [0], [1], [0, 0, 1, 1], [], []>} : vector<32x128xbf16>, vector<128x128xbf16>, vector<32x128xf32> -> vector<32x128xf32>
    %13 = arith.addf %6, %12 : vector<32x128xf32>
    %c0_18 = arith.constant 0 : index
    %c1_19 = arith.constant 1 : index
    %c0_20 = arith.constant 0 : index
    %14 = vector.load %arg12[%c0_18, %c1_19, %c0_20] : memref<2x18x128xf32, #tpu.memory_space<vmem>>, vector<2x16x128xf32>
    %15 = vector.shape_cast %14 : vector<2x16x128xf32> to vector<32x128xf32>
    %16 = arith.truncf %15 : vector<32x128xf32> to vector<32x128xbf16>
    %c1_21 = arith.constant 1 : index
    %c0_22 = arith.constant 0 : index
    %c0_23 = arith.constant 0 : index
    %17 = vector.load %arg1[%c1_21, %c0_22, %c0_23] : memref<3x128x128xbf16, #tpu.memory_space<vmem>>, vector<1x128x128xbf16>
    %18 = vector.shape_cast %17 : vector<1x128x128xbf16> to vector<128x128xbf16>
    %cst_24 = arith.constant dense<0.000000e+00> : vector<32x128xf32>
    %19 = tpu.matmul %16, %18, %cst_24 {dimension_numbers = #tpu.dot_dimension_numbers<[1], [0], [0], [1], [0, 0, 1, 1], [], []>} : vector<32x128xbf16>, vector<128x128xbf16>, vector<32x128xf32> -> vector<32x128xf32>
    %20 = arith.addf %13, %19 : vector<32x128xf32>
    %c0_25 = arith.constant 0 : index
    %c2 = arith.constant 2 : index
    %c0_26 = arith.constant 0 : index
    %21 = vector.load %arg12[%c0_25, %c2, %c0_26] : memref<2x18x128xf32, #tpu.memory_space<vmem>>, vector<2x16x128xf32>
    %22 = vector.shape_cast %21 : vector<2x16x128xf32> to vector<32x128xf32>
    %23 = arith.truncf %22 : vector<32x128xf32> to vector<32x128xbf16>
    %c2_27 = arith.constant 2 : index
    %c0_28 = arith.constant 0 : index
    %c0_29 = arith.constant 0 : index
    %24 = vector.load %arg1[%c2_27, %c0_28, %c0_29] : memref<3x128x128xbf16, #tpu.memory_space<vmem>>, vector<1x128x128xbf16>
    %25 = vector.shape_cast %24 : vector<1x128x128xbf16> to vector<128x128xbf16>
    %cst_30 = arith.constant dense<0.000000e+00> : vector<32x128xf32>
    %26 = tpu.matmul %23, %25, %cst_30 {dimension_numbers = #tpu.dot_dimension_numbers<[1], [0], [0], [1], [0, 0, 1, 1], [], []>} : vector<32x128xbf16>, vector<128x128xbf16>, vector<32x128xf32> -> vector<32x128xf32>
    %27 = arith.addf %20, %26 : vector<32x128xf32>
    %c0_31 = arith.constant 0 : index
    %c0_32 = arith.constant 0 : index
    %28 = vector.load %arg2[%c0_31, %c0_32] : memref<1x128xf32, #tpu.memory_space<vmem>>, vector<1x128xf32>
    %29 = vector.broadcast %28 : vector<1x128xf32> to vector<32x128xf32>
    %30 = arith.addf %27, %29 : vector<32x128xf32>
    %cst_33 = arith.constant 0.000000e+00 : f32
    %31 = vector.broadcast %cst_33 : f32 to vector<32x128xf32>
    %32 = arith.maximumf %30, %31 : vector<32x128xf32>
    %cst_34 = arith.constant dense<0.000000e+00> : vector<128xf32>
    %33 = vector.multi_reduction <add>, %32, %cst_34 [0] : vector<32x128xf32> to vector<128xf32>
    %34 = vector.shape_cast %33 : vector<128xf32> to vector<1x128xf32>
    %c0_35 = arith.constant 0 : index
    %c0_36 = arith.constant 0 : index
    %35 = vector.load %arg9[%c0_35, %c0_36] : memref<128x8xf32, #tpu.memory_space<vmem>>, vector<128x8xf32>
    %cst_37 = arith.constant dense<0.000000e+00> : vector<1x8xf32>
    %36 = tpu.matmul %34, %35, %cst_37 {dimension_numbers = #tpu.dot_dimension_numbers<[1], [0], [0], [1], [0, 0, 1, 1], [], []>, precision = #tpu.contract_precision<fp32>} : vector<1x128xf32>, vector<128x8xf32>, vector<1x8xf32> -> vector<1x8xf32>
    %37 = arith.mulf %32, %32 : vector<32x128xf32>
    %cst_38 = arith.constant dense<0.000000e+00> : vector<128xf32>
    %38 = vector.multi_reduction <add>, %37, %cst_38 [0] : vector<32x128xf32> to vector<128xf32>
    %39 = vector.shape_cast %38 : vector<128xf32> to vector<1x128xf32>
    %c0_39 = arith.constant 0 : index
    %c0_40 = arith.constant 0 : index
    %40 = vector.load %arg9[%c0_39, %c0_40] : memref<128x8xf32, #tpu.memory_space<vmem>>, vector<128x8xf32>
    %cst_41 = arith.constant dense<0.000000e+00> : vector<1x8xf32>
    %41 = tpu.matmul %39, %40, %cst_41 {dimension_numbers = #tpu.dot_dimension_numbers<[1], [0], [0], [1], [0, 0, 1, 1], [], []>, precision = #tpu.contract_precision<fp32>} : vector<1x128xf32>, vector<128x8xf32>, vector<1x8xf32> -> vector<1x8xf32>
    %cst_42 = arith.constant 0.001953125 : f32
    %42 = vector.broadcast %cst_42 : f32 to vector<1x8xf32>
    %43 = arith.mulf %36, %42 : vector<1x8xf32>
    %cst_43 = arith.constant 0.001953125 : f32
    %44 = vector.broadcast %cst_43 : f32 to vector<1x8xf32>
    %45 = arith.mulf %41, %44 : vector<1x8xf32>
    %46 = arith.mulf %43, %43 : vector<1x8xf32>
    %47 = arith.subf %45, %46 : vector<1x8xf32>
    %cst_44 = arith.constant 1.000000e-03 : f32
    %48 = vector.broadcast %cst_44 : f32 to vector<1x8xf32>
    %49 = arith.addf %47, %48 : vector<1x8xf32>
    %50 = math.rsqrt %49 : vector<1x8xf32>
    %c0_45 = arith.constant 0 : index
    %c0_46 = arith.constant 0 : index
    %51 = vector.load %arg10[%c0_45, %c0_46] : memref<8x128xf32, #tpu.memory_space<vmem>>, vector<8x128xf32>
    %cst_47 = arith.constant dense<0.000000e+00> : vector<1x128xf32>
    %52 = tpu.matmul %43, %51, %cst_47 {dimension_numbers = #tpu.dot_dimension_numbers<[1], [0], [0], [1], [0, 0, 1, 1], [], []>, precision = #tpu.contract_precision<fp32>} : vector<1x8xf32>, vector<8x128xf32>, vector<1x128xf32> -> vector<1x128xf32>
    %c0_48 = arith.constant 0 : index
    %c0_49 = arith.constant 0 : index
    %53 = vector.load %arg10[%c0_48, %c0_49] : memref<8x128xf32, #tpu.memory_space<vmem>>, vector<8x128xf32>
    %cst_50 = arith.constant dense<0.000000e+00> : vector<1x128xf32>
    %54 = tpu.matmul %50, %53, %cst_50 {dimension_numbers = #tpu.dot_dimension_numbers<[1], [0], [0], [1], [0, 0, 1, 1], [], []>, precision = #tpu.contract_precision<fp32>} : vector<1x8xf32>, vector<8x128xf32>, vector<1x128xf32> -> vector<1x128xf32>
    %c0_51 = arith.constant 0 : index
    %c0_52 = arith.constant 0 : index
    %55 = vector.load %arg3[%c0_51, %c0_52] : memref<1x128xf32, #tpu.memory_space<vmem>>, vector<1x128xf32>
    %56 = arith.mulf %55, %54 : vector<1x128xf32>
    %c0_53 = arith.constant 0 : index
    %c0_54 = arith.constant 0 : index
    %57 = vector.load %arg4[%c0_53, %c0_54] : memref<1x128xf32, #tpu.memory_space<vmem>>, vector<1x128xf32>
    %58 = arith.mulf %52, %56 : vector<1x128xf32>
    %59 = arith.subf %57, %58 : vector<1x128xf32>
    %60 = vector.broadcast %56 : vector<1x128xf32> to vector<32x128xf32>
    %61 = arith.mulf %32, %60 : vector<32x128xf32>
    %62 = vector.broadcast %59 : vector<1x128xf32> to vector<32x128xf32>
    %63 = arith.addf %61, %62 : vector<32x128xf32>
    %64 = vector.shape_cast %63 : vector<32x128xf32> to vector<2x16x128xf32>
    %c0_55 = arith.constant 0 : index
    %c1_56 = arith.constant 1 : index
    %c0_57 = arith.constant 0 : index
    %65 = vector.load %arg12[%c0_55, %c1_56, %c0_57] : memref<2x18x128xf32, #tpu.memory_space<vmem>>, vector<2x16x128xf32>
    tpu.vector_store %arg12[%c0_55, %c1_56, %c0_57], %64 {strides = array<i32>} : memref<2x18x128xf32, #tpu.memory_space<vmem>>, vector<2x16x128xf32>,
    %cst_58 = arith.constant 0.000000e+00 : f32
    %66 = vector.broadcast %cst_58 : f32 to vector<32x128xf32>
    %c0_59 = arith.constant 0 : index
    %c0_60 = arith.constant 0 : index
    %c0_61 = arith.constant 0 : index
    %67 = vector.load %arg12[%c0_59, %c0_60, %c0_61] : memref<2x18x128xf32, #tpu.memory_space<vmem>>, vector<2x16x128xf32>
    %68 = vector.shape_cast %67 : vector<2x16x128xf32> to vector<32x128xf32>
    %69 = arith.truncf %68 : vector<32x128xf32> to vector<32x128xbf16>
    %c0_62 = arith.constant 0 : index
    %c0_63 = arith.constant 0 : index
    %c0_64 = arith.constant 0 : index
    %70 = vector.load %arg5[%c0_62, %c0_63, %c0_64] : memref<3x128x128xbf16, #tpu.memory_space<vmem>>, vector<1x128x128xbf16>
    %71 = vector.shape_cast %70 : vector<1x128x128xbf16> to vector<128x128xbf16>
    %cst_65 = arith.constant dense<0.000000e+00> : vector<32x128xf32>
    %72 = tpu.matmul %69, %71, %cst_65 {dimension_numbers = #tpu.dot_dimension_numbers<[1], [0], [0], [1], [0, 0, 1, 1], [], []>} : vector<32x128xbf16>, vector<128x128xbf16>, vector<32x128xf32> -> vector<32x128xf32>
    %73 = arith.addf %66, %72 : vector<32x128xf32>
    %c0_66 = arith.constant 0 : index
    %c1_67 = arith.constant 1 : index
    %c0_68 = arith.constant 0 : index
    %74 = vector.load %arg12[%c0_66, %c1_67, %c0_68] : memref<2x18x128xf32, #tpu.memory_space<vmem>>, vector<2x16x128xf32>
    %75 = vector.shape_cast %74 : vector<2x16x128xf32> to vector<32x128xf32>
    %76 = arith.truncf %75 : vector<32x128xf32> to vector<32x128xbf16>
    %c1_69 = arith.constant 1 : index
    %c0_70 = arith.constant 0 : index
    %c0_71 = arith.constant 0 : index
    %77 = vector.load %arg5[%c1_69, %c0_70, %c0_71] : memref<3x128x128xbf16, #tpu.memory_space<vmem>>, vector<1x128x128xbf16>
    %78 = vector.shape_cast %77 : vector<1x128x128xbf16> to vector<128x128xbf16>
    %cst_72 = arith.constant dense<0.000000e+00> : vector<32x128xf32>
    %79 = tpu.matmul %76, %78, %cst_72 {dimension_numbers = #tpu.dot_dimension_numbers<[1], [0], [0], [1], [0, 0, 1, 1], [], []>} : vector<32x128xbf16>, vector<128x128xbf16>, vector<32x128xf32> -> vector<32x128xf32>
    %80 = arith.addf %73, %79 : vector<32x128xf32>
    %c0_73 = arith.constant 0 : index
    %c2_74 = arith.constant 2 : index
    %c0_75 = arith.constant 0 : index
    %81 = vector.load %arg12[%c0_73, %c2_74, %c0_75] : memref<2x18x128xf32, #tpu.memory_space<vmem>>, vector<2x16x128xf32>
    %82 = vector.shape_cast %81 : vector<2x16x128xf32> to vector<32x128xf32>
    %83 = arith.truncf %82 : vector<32x128xf32> to vector<32x128xbf16>
    %c2_76 = arith.constant 2 : index
    %c0_77 = arith.constant 0 : index
    %c0_78 = arith.constant 0 : index
    %84 = vector.load %arg5[%c2_76, %c0_77, %c0_78] : memref<3x128x128xbf16, #tpu.memory_space<vmem>>, vector<1x128x128xbf16>
    %85 = vector.shape_cast %84 : vector<1x128x128xbf16> to vector<128x128xbf16>
    %cst_79 = arith.constant dense<0.000000e+00> : vector<32x128xf32>
    %86 = tpu.matmul %83, %85, %cst_79 {dimension_numbers = #tpu.dot_dimension_numbers<[1], [0], [0], [1], [0, 0, 1, 1], [], []>} : vector<32x128xbf16>, vector<128x128xbf16>, vector<32x128xf32> -> vector<32x128xf32>
    %87 = arith.addf %80, %86 : vector<32x128xf32>
    %c0_80 = arith.constant 0 : index
    %c0_81 = arith.constant 0 : index
    %88 = vector.load %arg6[%c0_80, %c0_81] : memref<1x128xf32, #tpu.memory_space<vmem>>, vector<1x128xf32>
    %89 = vector.broadcast %88 : vector<1x128xf32> to vector<32x128xf32>
    %90 = arith.addf %87, %89 : vector<32x128xf32>
    %cst_82 = arith.constant 0.000000e+00 : f32
    %91 = vector.broadcast %cst_82 : f32 to vector<32x128xf32>
    %92 = arith.maximumf %90, %91 : vector<32x128xf32>
    %cst_83 = arith.constant dense<0.000000e+00> : vector<128xf32>
    %93 = vector.multi_reduction <add>, %92, %cst_83 [0] : vector<32x128xf32> to vector<128xf32>
    %94 = vector.shape_cast %93 : vector<128xf32> to vector<1x128xf32>
    %c0_84 = arith.constant 0 : index
    %c0_85 = arith.constant 0 : index
    %95 = vector.load %arg9[%c0_84, %c0_85] : memref<128x8xf32, #tpu.memory_space<vmem>>, vector<128x8xf32>
    %cst_86 = arith.constant dense<0.000000e+00> : vector<1x8xf32>
    %96 = tpu.matmul %94, %95, %cst_86 {dimension_numbers = #tpu.dot_dimension_numbers<[1], [0], [0], [1], [0, 0, 1, 1], [], []>, precision = #tpu.contract_precision<fp32>} : vector<1x128xf32>, vector<128x8xf32>, vector<1x8xf32> -> vector<1x8xf32>
    %97 = arith.mulf %92, %92 : vector<32x128xf32>
    %cst_87 = arith.constant dense<0.000000e+00> : vector<128xf32>
    %98 = vector.multi_reduction <add>, %97, %cst_87 [0] : vector<32x128xf32> to vector<128xf32>
    %99 = vector.shape_cast %98 : vector<128xf32> to vector<1x128xf32>
    %c0_88 = arith.constant 0 : index
    %c0_89 = arith.constant 0 : index
    %100 = vector.load %arg9[%c0_88, %c0_89] : memref<128x8xf32, #tpu.memory_space<vmem>>, vector<128x8xf32>
    %cst_90 = arith.constant dense<0.000000e+00> : vector<1x8xf32>
    %101 = tpu.matmul %99, %100, %cst_90 {dimension_numbers = #tpu.dot_dimension_numbers<[1], [0], [0], [1], [0, 0, 1, 1], [], []>, precision = #tpu.contract_precision<fp32>} : vector<1x128xf32>, vector<128x8xf32>, vector<1x8xf32> -> vector<1x8xf32>
    %cst_91 = arith.constant 0.001953125 : f32
    %102 = vector.broadcast %cst_91 : f32 to vector<1x8xf32>
    %103 = arith.mulf %96, %102 : vector<1x8xf32>
    %cst_92 = arith.constant 0.001953125 : f32
    %104 = vector.broadcast %cst_92 : f32 to vector<1x8xf32>
    %105 = arith.mulf %101, %104 : vector<1x8xf32>
    %106 = arith.mulf %103, %103 : vector<1x8xf32>
    %107 = arith.subf %105, %106 : vector<1x8xf32>
    %cst_93 = arith.constant 1.000000e-03 : f32
    %108 = vector.broadcast %cst_93 : f32 to vector<1x8xf32>
    %109 = arith.addf %107, %108 : vector<1x8xf32>
    %110 = math.rsqrt %109 : vector<1x8xf32>
    %c0_94 = arith.constant 0 : index
    %c0_95 = arith.constant 0 : index
    %111 = vector.load %arg10[%c0_94, %c0_95] : memref<8x128xf32, #tpu.memory_space<vmem>>, vector<8x128xf32>
    %cst_96 = arith.constant dense<0.000000e+00> : vector<1x128xf32>
    %112 = tpu.matmul %103, %111, %cst_96 {dimension_numbers = #tpu.dot_dimension_numbers<[1], [0], [0], [1], [0, 0, 1, 1], [], []>, precision = #tpu.contract_precision<fp32>} : vector<1x8xf32>, vector<8x128xf32>, vector<1x128xf32> -> vector<1x128xf32>
    %c0_97 = arith.constant 0 : index
    %c0_98 = arith.constant 0 : index
    %113 = vector.load %arg10[%c0_97, %c0_98] : memref<8x128xf32, #tpu.memory_space<vmem>>, vector<8x128xf32>
    %cst_99 = arith.constant dense<0.000000e+00> : vector<1x128xf32>
    %114 = tpu.matmul %110, %113, %cst_99 {dimension_numbers = #tpu.dot_dimension_numbers<[1], [0], [0], [1], [0, 0, 1, 1], [], []>, precision = #tpu.contract_precision<fp32>} : vector<1x8xf32>, vector<8x128xf32>, vector<1x128xf32> -> vector<1x128xf32>
    %c0_100 = arith.constant 0 : index
    %c0_101 = arith.constant 0 : index
    %115 = vector.load %arg7[%c0_100, %c0_101] : memref<1x128xf32, #tpu.memory_space<vmem>>, vector<1x128xf32>
    %116 = arith.mulf %115, %114 : vector<1x128xf32>
    %c0_102 = arith.constant 0 : index
    %c0_103 = arith.constant 0 : index
    %117 = vector.load %arg8[%c0_102, %c0_103] : memref<1x128xf32, #tpu.memory_space<vmem>>, vector<1x128xf32>
    %118 = arith.mulf %112, %116 : vector<1x128xf32>
    %119 = arith.subf %117, %118 : vector<1x128xf32>
    %120 = vector.broadcast %116 : vector<1x128xf32> to vector<32x128xf32>
    %121 = arith.mulf %92, %120 : vector<32x128xf32>
    %122 = vector.broadcast %119 : vector<1x128xf32> to vector<32x128xf32>
    %123 = arith.addf %121, %122 : vector<32x128xf32>
    %c0_104 = arith.constant 0 : index
    %c0_105 = arith.constant 0 : index
    %c0_106 = arith.constant 0 : index
    %124 = vector.load %arg0[%c0_104, %c0_105, %c0_106] : memref<2x16x128xf32, #tpu.memory_space<vmem>>, vector<2x16x128xf32>
    %125 = vector.shape_cast %124 : vector<2x16x128xf32> to vector<32x128xf32>
    %126 = arith.addf %123, %125 : vector<32x128xf32>
    %cst_107 = arith.constant 0.000000e+00 : f32
    %127 = vector.broadcast %cst_107 : f32 to vector<32x128xf32>
    %128 = arith.maximumf %126, %127 : vector<32x128xf32>
    %c0_108 = arith.constant 0 : index
    %c0_109 = arith.constant 0 : index
    %129 = vector.load %arg11[%c0_108, %c0_109] : memref<32x128xf32, #tpu.memory_space<vmem>>, vector<32x128xf32>
    tpu.vector_store %arg11[%c0_108, %c0_109], %128 {strides = array<i32>} : memref<32x128xf32, #tpu.memory_space<vmem>>, vector<32x128xf32>,
    return
  }
}

</mosaic_0001>

<llo_original>
// kernel: tpu_custom_call.1
$region0: #{tpu_custom_call.1}
  #allocation0 [shape = 'u32[]', space=smem, size = 0x4, offset = 0x4, fixed_abs, tag = 'smem constant byte address 0x4 - core index']
  #allocation1 [shape = 'u32[72,128]{1,0:T(1,128)}', space=vmem, size = 0x9000, scoped, tag = 'internal scratch']
  #allocation2 [shape = 'f32[2,18,128]{2,1,0:T(8,128)}', space=vmem, size = 0x6000, scoped, tag = 'scratch operand']
  %s0 = inlined_call_operand.vmem [shape: f32[2,16,128], index: 0, kind: input, shape index: {}]
  %s1 = inlined_call_operand.hbm [shape: bf16[3,128,128], index: 1, kind: input, shape index: {}]
  %s2 = inlined_call_operand.vmem [shape: f32[1,128], index: 2, kind: input, shape index: {}]
  %s3 = inlined_call_operand.vmem [shape: f32[1,128], index: 3, kind: input, shape index: {}]
  %s4 = inlined_call_operand.vmem [shape: f32[1,128], index: 4, kind: input, shape index: {}]
  %s5 = inlined_call_operand.hbm [shape: bf16[3,128,128], index: 5, kind: input, shape index: {}]
  %s6 = inlined_call_operand.vmem [shape: f32[1,128], index: 6, kind: input, shape index: {}]
  %s7 = inlined_call_operand.vmem [shape: f32[1,128], index: 7, kind: input, shape index: {}]
  %s8 = inlined_call_operand.vmem [shape: f32[1,128], index: 8, kind: input, shape index: {}]
  %s9 = inlined_call_operand.vmem [shape: f32[128,8], index: 9, kind: input, shape index: {}]
  %s10 = inlined_call_operand.vmem [shape: f32[8,128], index: 10, kind: input, shape index: {}]
  %s11 = inlined_call_operand.hbm [shape: f32[32,128], index: 11, kind: output, shape index: {}]
  %s12 = sld [smem:[#allocation0]]
  $region62: #{tpu_custom_call.1} parent=0
    _
  %s14 = ssub.s32 1, %s12
  %s15 = scalar_select 0, %s14, %s12
  $region1: #{tpu_custom_call.1} parent=0
    #allocation3 [shape = 'u8[98304]{0}', space=vmem, size = 0x18000, scoped, tag = 'input window, operand 1, single buffered']
    #allocation4 [shape = 's32[1]{0}', space=sflag, size = 0x4, scoped, tag = 'scoped memory for tpu_custom_call.1']
    #allocation5 [shape = 's32[1]{0}', space=sflag, size = 0x4, scoped, tag = 'scoped memory for tpu_custom_call.1']
    #allocation6 [shape = 'u8[98304]{0}', space=vmem, size = 0x18000, scoped, tag = 'input window, operand 5, single buffered']
    #allocation7 [shape = 's32[1]{0}', space=sflag, size = 0x4, scoped, tag = 'scoped memory for tpu_custom_call.1']
    #allocation8 [shape = 'u8[16384]{0}', space=vmem, size = 0x4000, scoped, tag = 'output window, operand 0, single buffered']
    %16 = vsyncpa [#allocation4], 0
    %17 = vsyncpa [#allocation7], 0
    %18 = vsyncpa [#allocation5], 0
    // Predicated region
    $region2: #{tpu_custom_call.1} parent=1 // pred_check
      _
    $region3: #{tpu_custom_call.1} parent=1 // pred_check_branch
      %20 = sbr.rel (0) target = $region5
    $region4: #{tpu_custom_call.1} parent=1 // pred_region
      _
    $region5: #{tpu_custom_call.1} parent=1 // pred_fallthru
      _
    // Predicated region
    $region6: #{tpu_custom_call.1} parent=1 // pred_check
      _
    $region7: #{tpu_custom_call.1} parent=1 // pred_check_branch
      %22 = sbr.rel (0) target = $region9
    $region8: #{tpu_custom_call.1} parent=1 // pred_region
      %24 = vsyncadd [#allocation4], 0
      %s25 = sshll.u32 %s1, 4
      %s26 = int_to_ptr.hbm [resolvable:$true] %s25
      %s27 = sshll.u32 [#allocation3], 4
      %s28 = int_to_ptr.vmem [resolvable:$true] %s27
      %33 = dma.hbm_to_vmem [thread:$0]  %s26, 3072, %s28, [#allocation4], 64, 64, 4
    $region9: #{tpu_custom_call.1} parent=1 // pred_fallthru
      _
    // Predicated region
    $region10: #{tpu_custom_call.1} parent=1 // pred_check
      _
    $region11: #{tpu_custom_call.1} parent=1 // pred_check_branch
      %35 = sbr.rel (0) target = $region13
    $region12: #{tpu_custom_call.1} parent=1 // pred_region
      _
    $region13: #{tpu_custom_call.1} parent=1 // pred_fallthru
      _
    // Predicated region
    $region14: #{tpu_custom_call.1} parent=1 // pred_check
      _
    $region15: #{tpu_custom_call.1} parent=1 // pred_check_branch
      %37 = sbr.rel (0) target = $region17
    $region16: #{tpu_custom_call.1} parent=1 // pred_region
      _
    $region17: #{tpu_custom_call.1} parent=1 // pred_fallthru
      _
    // Predicated region
    $region18: #{tpu_custom_call.1} parent=1 // pred_check
      _
    $region19: #{tpu_custom_call.1} parent=1 // pred_check_branch
      %39 = sbr.rel (0) target = $region21
    $region20: #{tpu_custom_call.1} parent=1 // pred_region
      _
    $region21: #{tpu_custom_call.1} parent=1 // pred_fallthru
      _
    // Predicated region
    $region22: #{tpu_custom_call.1} parent=1 // pred_check
      _
    $region23: #{tpu_custom_call.1} parent=1 // pred_check_branch
      %41 = sbr.rel (0) target = $region25
    $region24: #{tpu_custom_call.1} parent=1 // pred_region
      %43 = vsyncadd [#allocation7], 0
      %s44 = sshll.u32 %s5, 4
      %s45 = int_to_ptr.hbm [resolvable:$true] %s44
      %s46 = sshll.u32 [#allocation6], 4
      %s47 = int_to_ptr.vmem [resolvable:$true] %s46
      %52 = dma.hbm_to_vmem [thread:$0]  %s45, 3072, %s47, [#allocation7], 64, 64, 4
    $region25: #{tpu_custom_call.1} parent=1 // pred_fallthru
      _
    // Predicated region
    $region26: #{tpu_custom_call.1} parent=1 // pred_check
      _
    $region27: #{tpu_custom_call.1} parent=1 // pred_check_branch
      %54 = sbr.rel (0) target = $region29
    $region28: #{tpu_custom_call.1} parent=1 // pred_region
      _
    $region29: #{tpu_custom_call.1} parent=1 // pred_fallthru
      _
    // Predicated region
    $region30: #{tpu_custom_call.1} parent=1 // pred_check
      _
    $region31: #{tpu_custom_call.1} parent=1 // pred_check_branch
      %56 = sbr.rel (0) target = $region33
    $region32: #{tpu_custom_call.1} parent=1 // pred_region
      _
    $region33: #{tpu_custom_call.1} parent=1 // pred_fallthru
      _
    // Predicated region
    $region34: #{tpu_custom_call.1} parent=1 // pred_check
      _
    $region35: #{tpu_custom_call.1} parent=1 // pred_check_branch
      %58 = sbr.rel (0) target = $region37
    $region36: #{tpu_custom_call.1} parent=1 // pred_region
      _
    $region37: #{tpu_custom_call.1} parent=1 // pred_fallthru
      _
    // Predicated region
    $region38: #{tpu_custom_call.1} parent=1 // pred_check
      _
    $region39: #{tpu_custom_call.1} parent=1 // pred_check_branch
      %60 = sbr.rel (0) target = $region41
    $region40: #{tpu_custom_call.1} parent=1 // pred_region
      _
    $region41: #{tpu_custom_call.1} parent=1 // pred_fallthru
      _
    // Predicated region
    $region42: #{tpu_custom_call.1} parent=1 // pred_check
      _
    $region43: #{tpu_custom_call.1} parent=1 // pred_check_branch
      %62 = sbr.rel (0) target = $region45
    $region44: #{tpu_custom_call.1} parent=1 // pred_region
      _
    $region45: #{tpu_custom_call.1} parent=1 // pred_fallthru
      _
    // Predicated region
    $region46: #{tpu_custom_call.1} parent=1 // pred_check
      _
    $region47: #{tpu_custom_call.1} parent=1 // pred_check_branch
      %64 = sbr.rel (0) target = $region49
    $region48: #{tpu_custom_call.1} parent=1 // pred_region
      %66 = dma.done [#allocation4], 3072
    $region49: #{tpu_custom_call.1} parent=1 // pred_fallthru
      _
    // Predicated region
    $region50: #{tpu_custom_call.1} parent=1 // pred_check
      _
    $region51: #{tpu_custom_call.1} parent=1 // pred_check_branch
      %68 = sbr.rel (0) target = $region53
    $region52: #{tpu_custom_call.1} parent=1 // pred_region
      %70 = dma.done [#allocation7], 3072
    $region53: #{tpu_custom_call.1} parent=1 // pred_fallthru
      _
    %71 = vst [vmem:[#allocation2] sm:$0x1] 0.0
    %72 = vst [vmem:[#allocation2 + $0x18] sm:$0x1] 0.0
    %73 = vst [vmem:[#allocation2 + $0x11] sm:$0x1] 0.0
    %74 = vst [vmem:[#allocation2 + $0x29] sm:$0x1] 0.0
    %v75 = vld [vmem:[%s0] sm:$0xff]
    %v76 = vld [vmem:[%s0 + $0x8] sm:$0xff]
    %v77 = vld [vmem:[%s0 + $0x10] sm:$0xff]
    %v78 = vld [vmem:[%s0 + $0x18] sm:$0xff]
    %79 = vst [vmem:[#allocation2 + $0x1] sm:$0xff] %v75
    %80 = vst [vmem:[#allocation2 + $0x9] sm:$0xff] %v76
    %81 = vst [vmem:[#allocation2 + $0x19] sm:$0xff] %v77
    %82 = vst [vmem:[#allocation2 + $0x21] sm:$0xff] %v78
    %v83 = vld [vmem:[#allocation2] sm:$0xff]
    %v84 = vld [vmem:[#allocation2 + $0x8] sm:$0xff]
    %v85 = vld [vmem:[#allocation2 + $0x18] sm:$0xff]
    %v86 = vld [vmem:[#allocation2 + $0x20] sm:$0xff]
    %v87 = vpack.c.bf16 %v84, %v83
    %v88 = vpack.c.bf16 %v86, %v85
    %v89 = vld [vmem:[#allocation3] sm:$0xf]
    %v90 = vld [vmem:[#allocation3 + $0x4] sm:$0xf]
    %v91 = vld [vmem:[#allocation3 + $0x8] sm:$0xf]
    %v92 = vld [vmem:[#allocation3 + $0xc] sm:$0xf]
    %v93 = vld [vmem:[#allocation3 + $0x10] sm:$0xf]
    %v94 = vld [vmem:[#allocation3 + $0x14] sm:$0xf]
    %v95 = vld [vmem:[#allocation3 + $0x18] sm:$0xf]
    %v96 = vld [vmem:[#allocation3 + $0x1c] sm:$0xf]
    %v97 = vld [vmem:[#allocation3 + $0x20] sm:$0xf]
    %v98 = vld [vmem:[#allocation3 + $0x24] sm:$0xf]
    %v99 = vld [vmem:[#allocation3 + $0x28] sm:$0xf]
    %v100 = vld [vmem:[#allocation3 + $0x2c] sm:$0xf]
    %v101 = vld [vmem:[#allocation3 + $0x30] sm:$0xf]
    %v102 = vld [vmem:[#allocation3 + $0x34] sm:$0xf]
    %v103 = vld [vmem:[#allocation3 + $0x38] sm:$0xf]
    %v104 = vld [vmem:[#allocation3 + $0x3c] sm:$0xf]
    %v105 = vld [vmem:[#allocation2 + $0x1] sm:$0xff]
    %v106 = vld [vmem:[#allocation2 + $0x9] sm:$0xff]
    %v107 = vld [vmem:[#allocation2 + $0x19] sm:$0xff]
    %v108 = vld [vmem:[#allocation2 + $0x21] sm:$0xff]
    %v109 = vpack.c.bf16 %v106, %v105
    %v110 = vpack.c.bf16 %v108, %v107
    %s111 = scalar_lea.vmem [#allocation3], 64
    %v112 = vld [vmem:[%s111] sm:$0xf]
    %v113 = vld [vmem:[%s111 + $0x4] sm:$0xf]
    %v114 = vld [vmem:[%s111 + $0x8] sm:$0xf]
    %v115 = vld [vmem:[%s111 + $0xc] sm:$0xf]
    %v116 = vld [vmem:[%s111 + $0x10] sm:$0xf]
    %v117 = vld [vmem:[%s111 + $0x14] sm:$0xf]
    %v118 = vld [vmem:[%s111 + $0x18] sm:$0xf]
    %v119 = vld [vmem:[%s111 + $0x1c] sm:$0xf]
    %v120 = vld [vmem:[%s111 + $0x20] sm:$0xf]
    %v121 = vld [vmem:[%s111 + $0x24] sm:$0xf]
    %v122 = vld [vmem:[%s111 + $0x28] sm:$0xf]
    %v123 = vld [vmem:[%s111 + $0x2c] sm:$0xf]
    %v124 = vld [vmem:[%s111 + $0x30] sm:$0xf]
    %v125 = vld [vmem:[%s111 + $0x34] sm:$0xf]
    %v126 = vld [vmem:[%s111 + $0x38] sm:$0xf]
    %v127 = vld [vmem:[%s111 + $0x3c] sm:$0xf]
    %v144 = vunpack.c.l.b16 %v112
    %v145 = vunpack.c.l.b16 %v113
    %v146 = vunpack.c.l.b16 %v114
    %v147 = vunpack.c.l.b16 %v115
    %v148 = vunpack.c.l.b16 %v116
    %v149 = vunpack.c.l.b16 %v117
    %v150 = vunpack.c.l.b16 %v118
    %v151 = vunpack.c.l.b16 %v119
    %v152 = vunpack.c.l.b16 %v120
    %v153 = vunpack.c.l.b16 %v121
    %v154 = vunpack.c.l.b16 %v122
    %v155 = vunpack.c.l.b16 %v123
    %v156 = vunpack.c.l.b16 %v124
    %v157 = vunpack.c.l.b16 %v125
    %v158 = vunpack.c.l.b16 %v126
    %v159 = vunpack.c.l.b16 %v127
    %v160 = vpack.c.b16 %v145, %v144
    %v161 = vpack.c.b16 %v147, %v146
    %v162 = vpack.c.b16 %v149, %v148
    %v163 = vpack.c.b16 %v151, %v150
    %v164 = vpack.c.b16 %v153, %v152
    %v165 = vpack.c.b16 %v155, %v154
    %v166 = vpack.c.b16 %v157, %v156
    %v167 = vpack.c.b16 %v159, %v158
    %176 = vmatpush.bf16.msra.mxu0 %v167
    %177 = vmatpush.bf16.msra.mxu0 %v166
    %178 = vmatpush.bf16.msra.mxu0 %v165
    %179 = vmatpush.bf16.msra.mxu0 %v164
    %180 = vmatpush.bf16.msra.mxu0 %v163
    %181 = vmatpush.bf16.msra.mxu0 %v162
    %182 = vmatpush.bf16.msra.mxu0 %v161
    %183 = vmatpush.bf16.msra.mxu0 %v160
    %184 = vmatmul.bf16.gmra.mxu0 %v109
    %v185 = vpop.f32.mrf.mxu0
    %v186 = vadd.f32 0.0, %v185
    %v187 = vpop.f32.mrf.mxu0
    %v188 = vadd.f32 0.0, %v187
    %189 = vmatmul.bf16.gmra.mxu0 %v110
    %v190 = vpop.f32.mrf.mxu0
    %v191 = vadd.f32 0.0, %v190
    %v192 = vpop.f32.mrf.mxu0
    %v193 = vadd.f32 0.0, %v192
    %194 = vdwg.mxu0
    %v211 = vunpack.c.l.b16 %v89
    %v212 = vunpack.c.l.b16 %v90
    %v213 = vunpack.c.l.b16 %v91
    %v214 = vunpack.c.l.b16 %v92
    %v215 = vunpack.c.l.b16 %v93
    %v216 = vunpack.c.l.b16 %v94
    %v217 = vunpack.c.l.b16 %v95
    %v218 = vunpack.c.l.b16 %v96
    %v219 = vunpack.c.l.b16 %v97
    %v220 = vunpack.c.l.b16 %v98
    %v221 = vunpack.c.l.b16 %v99
    %v222 = vunpack.c.l.b16 %v100
    %v223 = vunpack.c.l.b16 %v101
    %v224 = vunpack.c.l.b16 %v102
    %v225 = vunpack.c.l.b16 %v103
    %v226 = vunpack.c.l.b16 %v104
    %v227 = vpack.c.b16 %v212, %v211
    %v228 = vpack.c.b16 %v214, %v213
    %v229 = vpack.c.b16 %v216, %v215
    %v230 = vpack.c.b16 %v218, %v217
    %v231 = vpack.c.b16 %v220, %v219
    %v232 = vpack.c.b16 %v222, %v221
    %v233 = vpack.c.b16 %v224, %v223
    %v234 = vpack.c.b16 %v226, %v225
    %243 = vmatpush.bf16.msra.mxu0 %v234
    %244 = vmatpush.bf16.msra.mxu0 %v233
    %245 = vmatpush.bf16.msra.mxu0 %v232
    %246 = vmatpush.bf16.msra.mxu0 %v231
    %247 = vmatpush.bf16.msra.mxu0 %v230
    %248 = vmatpush.bf16.msra.mxu0 %v229
    %249 = vmatpush.bf16.msra.mxu0 %v228
    %250 = vmatpush.bf16.msra.mxu0 %v227
    %251 = vmatmul.bf16.gmra.mxu0 %v87
    %v252 = vpop.f32.mrf.mxu0
    %v253 = vadd.f32 %v186, %v252
    %v254 = vpop.f32.mrf.mxu0
    %v255 = vadd.f32 %v188, %v254
    %256 = vmatmul.bf16.gmra.mxu0 %v88
    %v257 = vpop.f32.mrf.mxu0
    %v258 = vadd.f32 %v191, %v257
    %v259 = vpop.f32.mrf.mxu0
    %v260 = vadd.f32 %v193, %v259
    %261 = vdwg.mxu0
    %v262 = vld [vmem:[#allocation2 + $0x2] sm:$0xff]
    %v263 = vld [vmem:[#allocation2 + $0xa] sm:$0xff]
    %v264 = vld [vmem:[#allocation2 + $0x1a] sm:$0xff]
    %v265 = vld [vmem:[#allocation2 + $0x22] sm:$0xff]
    %v266 = vpack.c.bf16 %v263, %v262
    %v267 = vpack.c.bf16 %v265, %v264
    %s268 = scalar_lea.vmem [#allocation3], 128
    %v269 = vld [vmem:[%s268] sm:$0xf]
    %v270 = vld [vmem:[%s268 + $0x4] sm:$0xf]
    %v271 = vld [vmem:[%s268 + $0x8] sm:$0xf]
    %v272 = vld [vmem:[%s268 + $0xc] sm:$0xf]
    %v273 = vld [vmem:[%s268 + $0x10] sm:$0xf]
    %v274 = vld [vmem:[%s268 + $0x14] sm:$0xf]
    %v275 = vld [vmem:[%s268 + $0x18] sm:$0xf]
    %v276 = vld [vmem:[%s268 + $0x1c] sm:$0xf]
    %v277 = vld [vmem:[%s268 + $0x20] sm:$0xf]
    %v278 = vld [vmem:[%s268 + $0x24] sm:$0xf]
    %v279 = vld [vmem:[%s268 + $0x28] sm:$0xf]
    %v280 = vld [vmem:[%s268 + $0x2c] sm:$0xf]
    %v281 = vld [vmem:[%s268 + $0x30] sm:$0xf]
    %v282 = vld [vmem:[%s268 + $0x34] sm:$0xf]
    %v283 = vld [vmem:[%s268 + $0x38] sm:$0xf]
    %v284 = vld [vmem:[%s268 + $0x3c] sm:$0xf]
    %v301 = vunpack.c.l.b16 %v269
    %v302 = vunpack.c.l.b16 %v270
    %v303 = vunpack.c.l.b16 %v271
    %v304 = vunpack.c.l.b16 %v272
    %v305 = vunpack.c.l.b16 %v273
    %v306 = vunpack.c.l.b16 %v274
    %v307 = vunpack.c.l.b16 %v275
    %v308 = vunpack.c.l.b16 %v276
    %v309 = vunpack.c.l.b16 %v277
    %v310 = vunpack.c.l.b16 %v278
    %v311 = vunpack.c.l.b16 %v279
    %v312 = vunpack.c.l.b16 %v280
    %v313 = vunpack.c.l.b16 %v281
    %v314 = vunpack.c.l.b16 %v282
    %v315 = vunpack.c.l.b16 %v283
    %v316 = vunpack.c.l.b16 %v284
    %v317 = vpack.c.b16 %v302, %v301
    %v318 = vpack.c.b16 %v304, %v303
    %v319 = vpack.c.b16 %v306, %v305
    %v320 = vpack.c.b16 %v308, %v307
    %v321 = vpack.c.b16 %v310, %v309
    %v322 = vpack.c.b16 %v312, %v311
    %v323 = vpack.c.b16 %v314, %v313
    %v324 = vpack.c.b16 %v316, %v315
    %333 = vmatpush.bf16.msra.mxu0 %v324
    %334 = vmatpush.bf16.msra.mxu0 %v323
    %335 = vmatpush.bf16.msra.mxu0 %v322
    %336 = vmatpush.bf16.msra.mxu0 %v321
    %337 = vmatpush.bf16.msra.mxu0 %v320
    %338 = vmatpush.bf16.msra.mxu0 %v319
    %339 = vmatpush.bf16.msra.mxu0 %v318
    %340 = vmatpush.bf16.msra.mxu0 %v317
    %341 = vmatmul.bf16.gmra.mxu0 %v266
    %v342 = vpop.f32.mrf.mxu0
    %v343 = vadd.f32 0.0, %v342
    %v344 = vpop.f32.mrf.mxu0
    %v345 = vadd.f32 0.0, %v344
    %346 = vmatmul.bf16.gmra.mxu0 %v267
    %v347 = vpop.f32.mrf.mxu0
    %v348 = vadd.f32 0.0, %v347
    %v349 = vpop.f32.mrf.mxu0
    %v350 = vadd.f32 0.0, %v349
    %351 = vdwg.mxu0
    %v352 = vadd.f32 %v253, %v343
    %v353 = vadd.f32 %v255, %v345
    %v354 = vadd.f32 %v258, %v348
    %v355 = vadd.f32 %v260, %v350
    %v356 = vld [vmem:[%s2] sm:$0x1]
    %v358 = vperm.slane %v356, 0
    %v360 = vadd.f32 %v352, %v358
    %v361 = vadd.f32 %v353, %v358
    %v362 = vadd.f32 %v354, %v358
    %v363 = vadd.f32 %v355, %v358
    %v364 = vmax.f32 %v360, 0.0
    %v365 = vmax.f32 %v361, 0.0
    %v366 = vmax.f32 %v362, 0.0
    %v367 = vmax.f32 %v363, 0.0
    %v368 = vadd.f32 %v364, %v365
    %v369 = vadd.f32 %v368, %v366
    %v370 = vadd.f32 %v369, %v367
    %v371 = vrot.slane %v370, 4
    %v372 = vadd.f32 %v370, %v371
    %v373 = vrot.slane %v372, 2
    %v374 = vadd.f32 %v372, %v373
    %v375 = vrot.slane %v374, 1
    %v376 = vadd.f32 %v374, %v375
    %v377 = vld [vmem:[%s9] sm:$0xff]
    %v378 = vld [vmem:[%s9 + $0x8] sm:$0xff]
    %v379 = vld [vmem:[%s9 + $0x10] sm:$0xff]
    %v380 = vld [vmem:[%s9 + $0x18] sm:$0xff]
    %v381 = vld [vmem:[%s9 + $0x20] sm:$0xff]
    %v382 = vld [vmem:[%s9 + $0x28] sm:$0xff]
    %v383 = vld [vmem:[%s9 + $0x30] sm:$0xff]
    %v384 = vld [vmem:[%s9 + $0x38] sm:$0xff]
    %v385 = vld [vmem:[%s9 + $0x40] sm:$0xff]
    %v386 = vld [vmem:[%s9 + $0x48] sm:$0xff]
    %v387 = vld [vmem:[%s9 + $0x50] sm:$0xff]
    %v388 = vld [vmem:[%s9 + $0x58] sm:$0xff]
    %v389 = vld [vmem:[%s9 + $0x60] sm:$0xff]
    %v390 = vld [vmem:[%s9 + $0x68] sm:$0xff]
    %v391 = vld [vmem:[%s9 + $0x70] sm:$0xff]
    %v392 = vld [vmem:[%s9 + $0x78] sm:$0xff]
    %v393 = vand.u32 %v392, 4294901760
    %394 = vmatpush.msra.mxu0 %v393
    %v395 = vand.u32 %v391, 4294901760
    %396 = vmatpush.msra.mxu0 %v395
    %v397 = vand.u32 %v390, 4294901760
    %398 = vmatpush.msra.mxu0 %v397
    %v399 = vand.u32 %v389, 4294901760
    %400 = vmatpush.msra.mxu0 %v399
    %v401 = vand.u32 %v388, 4294901760
    %402 = vmatpush.msra.mxu0 %v401
    %v403 = vand.u32 %v387, 4294901760
    %404 = vmatpush.msra.mxu0 %v403
    %v405 = vand.u32 %v386, 4294901760
    %406 = vmatpush.msra.mxu0 %v405
    %v407 = vand.u32 %v385, 4294901760
    %408 = vmatpush.msra.mxu0 %v407
    %v409 = vand.u32 %v384, 4294901760
    %410 = vmatpush.msra.mxu0 %v409
    %v411 = vand.u32 %v383, 4294901760
    %412 = vmatpush.msra.mxu0 %v411
    %v413 = vand.u32 %v382, 4294901760
    %414 = vmatpush.msra.mxu0 %v413
    %v415 = vand.u32 %v381, 4294901760
    %416 = vmatpush.msra.mxu0 %v415
    %v417 = vand.u32 %v380, 4294901760
    %418 = vmatpush.msra.mxu0 %v417
    %v419 = vand.u32 %v379, 4294901760
    %420 = vmatpush.msra.mxu0 %v419
    %v421 = vand.u32 %v378, 4294901760
    %422 = vmatpush.msra.mxu0 %v421
    %v423 = vand.u32 %v377, 4294901760
    %424 = vmatpush.msra.mxu0 %v423
    %v425 = vand.u32 %v376, 4294901760
    %v426 = vsub.f32 %v376, %v425
    %v427 = vand.u32 %v426, 4294901760
    %v428 = vsub.f32 %v426, %v427
    %v429 = vand.u32 %v428, 4294901760
    %430 = vmatmul.f32.gmra.mxu0 %v429
    %v431 = vpop.f32.mrf.mxu0
    %v432 = vadd.f32 0.0, %v431
    %433 = vdwg.mxu0
    %v434 = vand.u32 %v392, 4294901760
    %v435 = vsub.f32 %v392, %v434
    %v436 = vand.u32 %v435, 4294901760
    %v437 = vsub.f32 %v435, %v436
    %v438 = vand.u32 %v437, 4294901760
    %439 = vmatpush.msra.mxu0 %v438
    %v440 = vand.u32 %v391, 4294901760
    %v441 = vsub.f32 %v391, %v440
    %v442 = vand.u32 %v441, 4294901760
    %v443 = vsub.f32 %v441, %v442
    %v444 = vand.u32 %v443, 4294901760
    %445 = vmatpush.msra.mxu0 %v444
    %v446 = vand.u32 %v390, 4294901760
    %v447 = vsub.f32 %v390, %v446
    %v448 = vand.u32 %v447, 4294901760
    %v449 = vsub.f32 %v447, %v448
    %v450 = vand.u32 %v449, 4294901760
    %451 = vmatpush.msra.mxu0 %v450
    %v452 = vand.u32 %v389, 4294901760
    %v453 = vsub.f32 %v389, %v452
    %v454 = vand.u32 %v453, 4294901760
    %v455 = vsub.f32 %v453, %v454
    %v456 = vand.u32 %v455, 4294901760
    %457 = vmatpush.msra.mxu0 %v456
    %v458 = vand.u32 %v388, 4294901760
    %v459 = vsub.f32 %v388, %v458
    %v460 = vand.u32 %v459, 4294901760
    %v461 = vsub.f32 %v459, %v460
    %v462 = vand.u32 %v461, 4294901760
    %463 = vmatpush.msra.mxu0 %v462
    %v464 = vand.u32 %v387, 4294901760
    %v465 = vsub.f32 %v387, %v464
    %v466 = vand.u32 %v465, 4294901760
    %v467 = vsub.f32 %v465, %v466
    %v468 = vand.u32 %v467, 4294901760
    %469 = vmatpush.msra.mxu0 %v468
    %v470 = vand.u32 %v386, 4294901760
    %v471 = vsub.f32 %v386, %v470
    %v472 = vand.u32 %v471, 4294901760
    %v473 = vsub.f32 %v471, %v472
    %v474 = vand.u32 %v473, 4294901760
    %475 = vmatpush.msra.mxu0 %v474
    %v476 = vand.u32 %v385, 4294901760
    %v477 = vsub.f32 %v385, %v476
    %v478 = vand.u32 %v477, 4294901760
    %v479 = vsub.f32 %v477, %v478
    %v480 = vand.u32 %v479, 4294901760
    %481 = vmatpush.msra.mxu0 %v480
    %v482 = vand.u32 %v384, 4294901760
    %v483 = vsub.f32 %v384, %v482
    %v484 = vand.u32 %v483, 4294901760
    %v485 = vsub.f32 %v483, %v484
    %v486 = vand.u32 %v485, 4294901760
    %487 = vmatpush.msra.mxu0 %v486
    %v488 = vand.u32 %v383, 4294901760
    %v489 = vsub.f32 %v383, %v488
    %v490 = vand.u32 %v489, 4294901760
    %v491 = vsub.f32 %v489, %v490
    %v492 = vand.u32 %v491, 4294901760
    %493 = vmatpush.msra.mxu0 %v492
    %v494 = vand.u32 %v382, 4294901760
    %v495 = vsub.f32 %v382, %v494
    %v496 = vand.u32 %v495, 4294901760
    %v497 = vsub.f32 %v495, %v496
    %v498 = vand.u32 %v497, 4294901760
    %499 = vmatpush.msra.mxu0 %v498
    %v500 = vand.u32 %v381, 4294901760
    %v501 = vsub.f32 %v381, %v500
    %v502 = vand.u32 %v501, 4294901760
    %v503 = vsub.f32 %v501, %v502
    %v504 = vand.u32 %v503, 4294901760
    %505 = vmatpush.msra.mxu0 %v504
    %v506 = vand.u32 %v380, 4294901760
    %v507 = vsub.f32 %v380, %v506
    %v508 = vand.u32 %v507, 4294901760
    %v509 = vsub.f32 %v507, %v508
    %v510 = vand.u32 %v509, 4294901760
    %511 = vmatpush.msra.mxu0 %v510
    %v512 = vand.u32 %v379, 4294901760
    %v513 = vsub.f32 %v379, %v512
    %v514 = vand.u32 %v513, 4294901760
    %v515 = vsub.f32 %v513, %v514
    %v516 = vand.u32 %v515, 4294901760
    %517 = vmatpush.msra.mxu0 %v516
    %v518 = vand.u32 %v378, 4294901760
    %v519 = vsub.f32 %v378, %v518
    %v520 = vand.u32 %v519, 4294901760
    %v521 = vsub.f32 %v519, %v520
    %v522 = vand.u32 %v521, 4294901760
    %523 = vmatpush.msra.mxu0 %v522
    %v524 = vand.u32 %v377, 4294901760
    %v525 = vsub.f32 %v377, %v524
    %v526 = vand.u32 %v525, 4294901760
    %v527 = vsub.f32 %v525, %v526
    %v528 = vand.u32 %v527, 4294901760
    %529 = vmatpush.msra.mxu0 %v528
    %v530 = vand.u32 %v376, 4294901760
    %531 = vmatmul.f32.gmra.mxu0 %v530
    %v532 = vpop.f32.mrf.mxu0
    %v533 = vadd.f32 %v432, %v532
    %534 = vdwg.mxu0
    %v535 = vand.u32 %v392, 4294901760
    %v536 = vsub.f32 %v392, %v535
    %537 = vmatpush.msra.mxu0 %v536
    %v538 = vand.u32 %v391, 4294901760
    %v539 = vsub.f32 %v391, %v538
    %540 = vmatpush.msra.mxu0 %v539
    %v541 = vand.u32 %v390, 4294901760
    %v542 = vsub.f32 %v390, %v541
    %543 = vmatpush.msra.mxu0 %v542
    %v544 = vand.u32 %v389, 4294901760
    %v545 = vsub.f32 %v389, %v544
    %546 = vmatpush.msra.mxu0 %v545
    %v547 = vand.u32 %v388, 4294901760
    %v548 = vsub.f32 %v388, %v547
    %549 = vmatpush.msra.mxu0 %v548
    %v550 = vand.u32 %v387, 4294901760
    %v551 = vsub.f32 %v387, %v550
    %552 = vmatpush.msra.mxu0 %v551
    %v553 = vand.u32 %v386, 4294901760
    %v554 = vsub.f32 %v386, %v553
    %555 = vmatpush.msra.mxu0 %v554
    %v556 = vand.u32 %v385, 4294901760
    %v557 = vsub.f32 %v385, %v556
    %558 = vmatpush.msra.mxu0 %v557
    %v559 = vand.u32 %v384, 4294901760
    %v560 = vsub.f32 %v384, %v559
    %561 = vmatpush.msra.mxu0 %v560
    %v562 = vand.u32 %v383, 4294901760
    %v563 = vsub.f32 %v383, %v562
    %564 = vmatpush.msra.mxu0 %v563
    %v565 = vand.u32 %v382, 4294901760
    %v566 = vsub.f32 %v382, %v565
    %567 = vmatpush.msra.mxu0 %v566
    %v568 = vand.u32 %v381, 4294901760
    %v569 = vsub.f32 %v381, %v568
    %570 = vmatpush.msra.mxu0 %v569
    %v571 = vand.u32 %v380, 4294901760
    %v572 = vsub.f32 %v380, %v571
    %573 = vmatpush.msra.mxu0 %v572
    %v574 = vand.u32 %v379, 4294901760
    %v575 = vsub.f32 %v379, %v574
    %576 = vmatpush.msra.mxu0 %v575
    %v577 = vand.u32 %v378, 4294901760
    %v578 = vsub.f32 %v378, %v577
    %579 = vmatpush.msra.mxu0 %v578
    %v580 = vand.u32 %v377, 4294901760
    %v581 = vsub.f32 %v377, %v580
    %582 = vmatpush.msra.mxu0 %v581
    %v583 = vand.u32 %v376, 4294901760
    %v584 = vsub.f32 %v376, %v583
    %585 = vmatmul.f32.gmra.mxu0 %v584
    %v586 = vpop.f32.mrf.mxu0
    %v587 = vadd.f32 %v533, %v586
    %588 = vdwg.mxu0
    %v589 = vand.u32 %v392, 4294901760
    %590 = vmatpush.msra.mxu0 %v589
    %v591 = vand.u32 %v391, 4294901760
    %592 = vmatpush.msra.mxu0 %v591
    %v593 = vand.u32 %v390, 4294901760
    %594 = vmatpush.msra.mxu0 %v593
    %v595 = vand.u32 %v389, 4294901760
    %596 = vmatpush.msra.mxu0 %v595
    %v597 = vand.u32 %v388, 4294901760
    %598 = vmatpush.msra.mxu0 %v597
    %v599 = vand.u32 %v387, 4294901760
    %600 = vmatpush.msra.mxu0 %v599
    %v601 = vand.u32 %v386, 4294901760
    %602 = vmatpush.msra.mxu0 %v601
    %v603 = vand.u32 %v385, 4294901760
    %604 = vmatpush.msra.mxu0 %v603
    %v605 = vand.u32 %v384, 4294901760
    %606 = vmatpush.msra.mxu0 %v605
    %v607 = vand.u32 %v383, 4294901760
    %608 = vmatpush.msra.mxu0 %v607
    %v609 = vand.u32 %v382, 4294901760
    %610 = vmatpush.msra.mxu0 %v609
    %v611 = vand.u32 %v381, 4294901760
    %612 = vmatpush.msra.mxu0 %v611
    %v613 = vand.u32 %v380, 4294901760
    %614 = vmatpush.msra.mxu0 %v613
    %v615 = vand.u32 %v379, 4294901760
    %616 = vmatpush.msra.mxu0 %v615
    %v617 = vand.u32 %v378, 4294901760
    %618 = vmatpush.msra.mxu0 %v617
    %v619 = vand.u32 %v377, 4294901760
    %620 = vmatpush.msra.mxu0 %v619
    %v621 = vand.u32 %v376, 4294901760
    %v622 = vsub.f32 %v376, %v621
    %v623 = vand.u32 %v622, 4294901760
    %624 = vmatmul.f32.gmra.mxu0 %v623
    %v625 = vpop.f32.mrf.mxu0
    %v626 = vadd.f32 %v587, %v625
    %627 = vdwg.mxu0
    %v628 = vand.u32 %v392, 4294901760
    %v629 = vsub.f32 %v392, %v628
    %v630 = vand.u32 %v629, 4294901760
    %631 = vmatpush.msra.mxu0 %v630
    %v632 = vand.u32 %v391, 4294901760
    %v633 = vsub.f32 %v391, %v632
    %v634 = vand.u32 %v633, 4294901760
    %635 = vmatpush.msra.mxu0 %v634
    %v636 = vand.u32 %v390, 4294901760
    %v637 = vsub.f32 %v390, %v636
    %v638 = vand.u32 %v637, 4294901760
    %639 = vmatpush.msra.mxu0 %v638
    %v640 = vand.u32 %v389, 4294901760
    %v641 = vsub.f32 %v389, %v640
    %v642 = vand.u32 %v641, 4294901760
    %643 = vmatpush.msra.mxu0 %v642
    %v644 = vand.u32 %v388, 4294901760
    %v645 = vsub.f32 %v388, %v644
    %v646 = vand.u32 %v645, 4294901760
    %647 = vmatpush.msra.mxu0 %v646
    %v648 = vand.u32 %v387, 4294901760
    %v649 = vsub.f32 %v387, %v648
    %v650 = vand.u32 %v649, 4294901760
    %651 = vmatpush.msra.mxu0 %v650
    %v652 = vand.u32 %v386, 4294901760
    %v653 = vsub.f32 %v386, %v652
    %v654 = vand.u32 %v653, 4294901760
    %655 = vmatpush.msra.mxu0 %v654
    %v656 = vand.u32 %v385, 4294901760
    %v657 = vsub.f32 %v385, %v656
    %v658 = vand.u32 %v657, 4294901760
    %659 = vmatpush.msra.mxu0 %v658
    %v660 = vand.u32 %v384, 4294901760
    %v661 = vsub.f32 %v384, %v660
    %v662 = vand.u32 %v661, 4294901760
    %663 = vmatpush.msra.mxu0 %v662
    %v664 = vand.u32 %v383, 4294901760
    %v665 = vsub.f32 %v383, %v664
    %v666 = vand.u32 %v665, 4294901760
    %667 = vmatpush.msra.mxu0 %v666
    %v668 = vand.u32 %v382, 4294901760
    %v669 = vsub.f32 %v382, %v668
    %v670 = vand.u32 %v669, 4294901760
    %671 = vmatpush.msra.mxu0 %v670
    %v672 = vand.u32 %v381, 4294901760
    %v673 = vsub.f32 %v381, %v672
    %v674 = vand.u32 %v673, 4294901760
    %675 = vmatpush.msra.mxu0 %v674
    %v676 = vand.u32 %v380, 4294901760
    %v677 = vsub.f32 %v380, %v676
    %v678 = vand.u32 %v677, 4294901760
    %679 = vmatpush.msra.mxu0 %v678
    %v680 = vand.u32 %v379, 4294901760
    %v681 = vsub.f32 %v379, %v680
    %v682 = vand.u32 %v681, 4294901760
    %683 = vmatpush.msra.mxu0 %v682
    %v684 = vand.u32 %v378, 4294901760
    %v685 = vsub.f32 %v378, %v684
    %v686 = vand.u32 %v685, 4294901760
    %687 = vmatpush.msra.mxu0 %v686
    %v688 = vand.u32 %v377, 4294901760
    %v689 = vsub.f32 %v377, %v688
    %v690 = vand.u32 %v689, 4294901760
    %691 = vmatpush.msra.mxu0 %v690
    %v692 = vand.u32 %v376, 4294901760
    %693 = vmatmul.f32.gmra.mxu0 %v692
    %v694 = vpop.f32.mrf.mxu0
    %v695 = vadd.f32 %v626, %v694
    %696 = vdwg.mxu0
    %v697 = vand.u32 %v392, 4294901760
    %698 = vmatpush.msra.mxu0 %v697
    %v699 = vand.u32 %v391, 4294901760
    %700 = vmatpush.msra.mxu0 %v699
    %v701 = vand.u32 %v390, 4294901760
    %702 = vmatpush.msra.mxu0 %v701
    %v703 = vand.u32 %v389, 4294901760
    %704 = vmatpush.msra.mxu0 %v703
    %v705 = vand.u32 %v388, 4294901760
    %706 = vmatpush.msra.mxu0 %v705
    %v707 = vand.u32 %v387, 4294901760
    %708 = vmatpush.msra.mxu0 %v707
    %v709 = vand.u32 %v386, 4294901760
    %710 = vmatpush.msra.mxu0 %v709
    %v711 = vand.u32 %v385, 4294901760
    %712 = vmatpush.msra.mxu0 %v711
    %v713 = vand.u32 %v384, 4294901760
    %714 = vmatpush.msra.mxu0 %v713
    %v715 = vand.u32 %v383, 4294901760
    %716 = vmatpush.msra.mxu0 %v715
    %v717 = vand.u32 %v382, 4294901760
    %718 = vmatpush.msra.mxu0 %v717
    %v719 = vand.u32 %v381, 4294901760
    %720 = vmatpush.msra.mxu0 %v719
    %v721 = vand.u32 %v380, 4294901760
    %722 = vmatpush.msra.mxu0 %v721
    %v723 = vand.u32 %v379, 4294901760
    %724 = vmatpush.msra.mxu0 %v723
    %v725 = vand.u32 %v378, 4294901760
    %726 = vmatpush.msra.mxu0 %v725
    %v727 = vand.u32 %v377, 4294901760
    %728 = vmatpush.msra.mxu0 %v727
    %v729 = vand.u32 %v376, 4294901760
    %730 = vmatmul.f32.gmra.mxu0 %v729
    %v731 = vpop.f32.mrf.mxu0
    %v732 = vadd.f32 %v695, %v731
    %733 = vdwg.mxu0
    %v734 = vmul.f32 %v364, %v364
    %v735 = vmul.f32 %v365, %v365
    %v736 = vmul.f32 %v366, %v366
    %v737 = vmul.f32 %v367, %v367
    %v738 = vadd.f32 %v734, %v735
    %v739 = vadd.f32 %v738, %v736
    %v740 = vadd.f32 %v739, %v737
    %v741 = vrot.slane %v740, 4
    %v742 = vadd.f32 %v740, %v741
    %v743 = vrot.slane %v742, 2
    %v744 = vadd.f32 %v742, %v743
    %v745 = vrot.slane %v744, 1
    %v746 = vadd.f32 %v744, %v745
    %v747 = vand.u32 %v392, 4294901760
    %748 = vmatpush.msra.mxu0 %v747
    %v749 = vand.u32 %v391, 4294901760
    %750 = vmatpush.msra.mxu0 %v749
    %v751 = vand.u32 %v390, 4294901760
    %752 = vmatpush.msra.mxu0 %v751
    %v753 = vand.u32 %v389, 4294901760
    %754 = vmatpush.msra.mxu0 %v753
    %v755 = vand.u32 %v388, 4294901760
    %756 = vmatpush.msra.mxu0 %v755
    %v757 = vand.u32 %v387, 4294901760
    %758 = vmatpush.msra.mxu0 %v757
    %v759 = vand.u32 %v386, 4294901760
    %760 = vmatpush.msra.mxu0 %v759
    %v761 = vand.u32 %v385, 4294901760
    %762 = vmatpush.msra.mxu0 %v761
    %v763 = vand.u32 %v384, 4294901760
    %764 = vmatpush.msra.mxu0 %v763
    %v765 = vand.u32 %v383, 4294901760
    %766 = vmatpush.msra.mxu0 %v765
    %v767 = vand.u32 %v382, 4294901760
    %768 = vmatpush.msra.mxu0 %v767
    %v769 = vand.u32 %v381, 4294901760
    %770 = vmatpush.msra.mxu0 %v769
    %v771 = vand.u32 %v380, 4294901760
    %772 = vmatpush.msra.mxu0 %v771
    %v773 = vand.u32 %v379, 4294901760
    %774 = vmatpush.msra.mxu0 %v773
    %v775 = vand.u32 %v378, 4294901760
    %776 = vmatpush.msra.mxu0 %v775
    %v777 = vand.u32 %v377, 4294901760
    %778 = vmatpush.msra.mxu0 %v777
    %v779 = vand.u32 %v746, 4294901760
    %v780 = vsub.f32 %v746, %v779
    %v781 = vand.u32 %v780, 4294901760
    %v782 = vsub.f32 %v780, %v781
    %v783 = vand.u32 %v782, 4294901760
    %784 = vmatmul.f32.gmra.mxu0 %v783
    %v785 = vpop.f32.mrf.mxu0
    %v786 = vadd.f32 0.0, %v785
    %787 = vdwg.mxu0
    %v788 = vand.u32 %v392, 4294901760
    %v789 = vsub.f32 %v392, %v788
    %v790 = vand.u32 %v789, 4294901760
    %v791 = vsub.f32 %v789, %v790
    %v792 = vand.u32 %v791, 4294901760
    %793 = vmatpush.msra.mxu0 %v792
    %v794 = vand.u32 %v391, 4294901760
    %v795 = vsub.f32 %v391, %v794
    %v796 = vand.u32 %v795, 4294901760
    %v797 = vsub.f32 %v795, %v796
    %v798 = vand.u32 %v797, 4294901760
    %799 = vmatpush.msra.mxu0 %v798
    %v800 = vand.u32 %v390, 4294901760
    %v801 = vsub.f32 %v390, %v800
    %v802 = vand.u32 %v801, 4294901760
    %v803 = vsub.f32 %v801, %v802
    %v804 = vand.u32 %v803, 4294901760
    %805 = vmatpush.msra.mxu0 %v804
    %v806 = vand.u32 %v389, 4294901760
    %v807 = vsub.f32 %v389, %v806
    %v808 = vand.u32 %v807, 4294901760
    %v809 = vsub.f32 %v807, %v808
    %v810 = vand.u32 %v809, 4294901760
    %811 = vmatpush.msra.mxu0 %v810
    %v812 = vand.u32 %v388, 4294901760
    %v813 = vsub.f32 %v388, %v812
    %v814 = vand.u32 %v813, 4294901760
    %v815 = vsub.f32 %v813, %v814
    %v816 = vand.u32 %v815, 4294901760
    %817 = vmatpush.msra.mxu0 %v816
    %v818 = vand.u32 %v387, 4294901760
    %v819 = vsub.f32 %v387, %v818
    %v820 = vand.u32 %v819, 4294901760
    %v821 = vsub.f32 %v819, %v820
    %v822 = vand.u32 %v821, 4294901760
    %823 = vmatpush.msra.mxu0 %v822
    %v824 = vand.u32 %v386, 4294901760
    %v825 = vsub.f32 %v386, %v824
    %v826 = vand.u32 %v825, 4294901760
    %v827 = vsub.f32 %v825, %v826
    %v828 = vand.u32 %v827, 4294901760
    %829 = vmatpush.msra.mxu0 %v828
    %v830 = vand.u32 %v385, 4294901760
    %v831 = vsub.f32 %v385, %v830
    %v832 = vand.u32 %v831, 4294901760
    %v833 = vsub.f32 %v831, %v832
    %v834 = vand.u32 %v833, 4294901760
    %835 = vmatpush.msra.mxu0 %v834
    %v836 = vand.u32 %v384, 4294901760
    %v837 = vsub.f32 %v384, %v836
    %v838 = vand.u32 %v837, 4294901760
    %v839 = vsub.f32 %v837, %v838
    %v840 = vand.u32 %v839, 4294901760
    %841 = vmatpush.msra.mxu0 %v840
    %v842 = vand.u32 %v383, 4294901760
    %v843 = vsub.f32 %v383, %v842
    %v844 = vand.u32 %v843, 4294901760
    %v845 = vsub.f32 %v843, %v844
    %v846 = vand.u32 %v845, 4294901760
    %847 = vmatpush.msra.mxu0 %v846
    %v848 = vand.u32 %v382, 4294901760
    %v849 = vsub.f32 %v382, %v848
    %v850 = vand.u32 %v849, 4294901760
    %v851 = vsub.f32 %v849, %v850
    %v852 = vand.u32 %v851, 4294901760
    %853 = vmatpush.msra.mxu0 %v852
    %v854 = vand.u32 %v381, 4294901760
    %v855 = vsub.f32 %v381, %v854
    %v856 = vand.u32 %v855, 4294901760
    %v857 = vsub.f32 %v855, %v856
    %v858 = vand.u32 %v857, 4294901760
    %859 = vmatpush.msra.mxu0 %v858
    %v860 = vand.u32 %v380, 4294901760
    %v861 = vsub.f32 %v380, %v860
    %v862 = vand.u32 %v861, 4294901760
    %v863 = vsub.f32 %v861, %v862
    %v864 = vand.u32 %v863, 4294901760
    %865 = vmatpush.msra.mxu0 %v864
    %v866 = vand.u32 %v379, 4294901760
    %v867 = vsub.f32 %v379, %v866
    %v868 = vand.u32 %v867, 4294901760
    %v869 = vsub.f32 %v867, %v868
    %v870 = vand.u32 %v869, 4294901760
    %871 = vmatpush.msra.mxu0 %v870
    %v872 = vand.u32 %v378, 4294901760
    %v873 = vsub.f32 %v378, %v872
    %v874 = vand.u32 %v873, 4294901760
    %v875 = vsub.f32 %v873, %v874
    %v876 = vand.u32 %v875, 4294901760
    %877 = vmatpush.msra.mxu0 %v876
    %v878 = vand.u32 %v377, 4294901760
    %v879 = vsub.f32 %v377, %v878
    %v880 = vand.u32 %v879, 4294901760
    %v881 = vsub.f32 %v879, %v880
    %v882 = vand.u32 %v881, 4294901760
    %883 = vmatpush.msra.mxu0 %v882
    %v884 = vand.u32 %v746, 4294901760
    %885 = vmatmul.f32.gmra.mxu0 %v884
    %v886 = vpop.f32.mrf.mxu0
    %v887 = vadd.f32 %v786, %v886
    %888 = vdwg.mxu0
    %v889 = vand.u32 %v392, 4294901760
    %v890 = vsub.f32 %v392, %v889
    %891 = vmatpush.msra.mxu0 %v890
    %v892 = vand.u32 %v391, 4294901760
    %v893 = vsub.f32 %v391, %v892
    %894 = vmatpush.msra.mxu0 %v893
    %v895 = vand.u32 %v390, 4294901760
    %v896 = vsub.f32 %v390, %v895
    %897 = vmatpush.msra.mxu0 %v896
    %v898 = vand.u32 %v389, 4294901760
    %v899 = vsub.f32 %v389, %v898
    %900 = vmatpush.msra.mxu0 %v899
    %v901 = vand.u32 %v388, 4294901760
    %v902 = vsub.f32 %v388, %v901
    %903 = vmatpush.msra.mxu0 %v902
    %v904 = vand.u32 %v387, 4294901760
    %v905 = vsub.f32 %v387, %v904
    %906 = vmatpush.msra.mxu0 %v905
    %v907 = vand.u32 %v386, 4294901760
    %v908 = vsub.f32 %v386, %v907
    %909 = vmatpush.msra.mxu0 %v908
    %v910 = vand.u32 %v385, 4294901760
    %v911 = vsub.f32 %v385, %v910
    %912 = vmatpush.msra.mxu0 %v911
    %v913 = vand.u32 %v384, 4294901760
    %v914 = vsub.f32 %v384, %v913
    %915 = vmatpush.msra.mxu0 %v914
    %v916 = vand.u32 %v383, 4294901760
    %v917 = vsub.f32 %v383, %v916
    %918 = vmatpush.msra.mxu0 %v917
    %v919 = vand.u32 %v382, 4294901760
    %v920 = vsub.f32 %v382, %v919
    %921 = vmatpush.msra.mxu0 %v920
    %v922 = vand.u32 %v381, 4294901760
    %v923 = vsub.f32 %v381, %v922
    %924 = vmatpush.msra.mxu0 %v923
    %v925 = vand.u32 %v380, 4294901760
    %v926 = vsub.f32 %v380, %v925
    %927 = vmatpush.msra.mxu0 %v926
    %v928 = vand.u32 %v379, 4294901760
    %v929 = vsub.f32 %v379, %v928
    %930 = vmatpush.msra.mxu0 %v929
    %v931 = vand.u32 %v378, 4294901760
    %v932 = vsub.f32 %v378, %v931
    %933 = vmatpush.msra.mxu0 %v932
    %v934 = vand.u32 %v377, 4294901760
    %v935 = vsub.f32 %v377, %v934
    %936 = vmatpush.msra.mxu0 %v935
    %v937 = vand.u32 %v746, 4294901760
    %v938 = vsub.f32 %v746, %v937
    %939 = vmatmul.f32.gmra.mxu0 %v938
    %v940 = vpop.f32.mrf.mxu0
    %v941 = vadd.f32 %v887, %v940
    %942 = vdwg.mxu0
    %v943 = vand.u32 %v392, 4294901760
    %944 = vmatpush.msra.mxu0 %v943
    %v945 = vand.u32 %v391, 4294901760
    %946 = vmatpush.msra.mxu0 %v945
    %v947 = vand.u32 %v390, 4294901760
    %948 = vmatpush.msra.mxu0 %v947
    %v949 = vand.u32 %v389, 4294901760
    %950 = vmatpush.msra.mxu0 %v949
    %v951 = vand.u32 %v388, 4294901760
    %952 = vmatpush.msra.mxu0 %v951
    %v953 = vand.u32 %v387, 4294901760
    %954 = vmatpush.msra.mxu0 %v953
    %v955 = vand.u32 %v386, 4294901760
    %956 = vmatpush.msra.mxu0 %v955
    %v957 = vand.u32 %v385, 4294901760
    %958 = vmatpush.msra.mxu0 %v957
    %v959 = vand.u32 %v384, 4294901760
    %960 = vmatpush.msra.mxu0 %v959
    %v961 = vand.u32 %v383, 4294901760
    %962 = vmatpush.msra.mxu0 %v961
    %v963 = vand.u32 %v382, 4294901760
    %964 = vmatpush.msra.mxu0 %v963
    %v965 = vand.u32 %v381, 4294901760
    %966 = vmatpush.msra.mxu0 %v965
    %v967 = vand.u32 %v380, 4294901760
    %968 = vmatpush.msra.mxu0 %v967
    %v969 = vand.u32 %v379, 4294901760
    %970 = vmatpush.msra.mxu0 %v969
    %v971 = vand.u32 %v378, 4294901760
    %972 = vmatpush.msra.mxu0 %v971
    %v973 = vand.u32 %v377, 4294901760
    %974 = vmatpush.msra.mxu0 %v973
    %v975 = vand.u32 %v746, 4294901760
    %v976 = vsub.f32 %v746, %v975
    %v977 = vand.u32 %v976, 4294901760
    %978 = vmatmul.f32.gmra.mxu0 %v977
    %v979 = vpop.f32.mrf.mxu0
    %v980 = vadd.f32 %v941, %v979
    %981 = vdwg.mxu0
    %v982 = vand.u32 %v392, 4294901760
    %v983 = vsub.f32 %v392, %v982
    %v984 = vand.u32 %v983, 4294901760
    %985 = vmatpush.msra.mxu0 %v984
    %v986 = vand.u32 %v391, 4294901760
    %v987 = vsub.f32 %v391, %v986
    %v988 = vand.u32 %v987, 4294901760
    %989 = vmatpush.msra.mxu0 %v988
    %v990 = vand.u32 %v390, 4294901760
    %v991 = vsub.f32 %v390, %v990
    %v992 = vand.u32 %v991, 4294901760
    %993 = vmatpush.msra.mxu0 %v992
    %v994 = vand.u32 %v389, 4294901760
    %v995 = vsub.f32 %v389, %v994
    %v996 = vand.u32 %v995, 4294901760
    %997 = vmatpush.msra.mxu0 %v996
    %v998 = vand.u32 %v388, 4294901760
    %v999 = vsub.f32 %v388, %v998
    %v1000 = vand.u32 %v999, 4294901760
    %1001 = vmatpush.msra.mxu0 %v1000
    %v1002 = vand.u32 %v387, 4294901760
    %v1003 = vsub.f32 %v387, %v1002
    %v1004 = vand.u32 %v1003, 4294901760
    %1005 = vmatpush.msra.mxu0 %v1004
    %v1006 = vand.u32 %v386, 4294901760
    %v1007 = vsub.f32 %v386, %v1006
    %v1008 = vand.u32 %v1007, 4294901760
    %1009 = vmatpush.msra.mxu0 %v1008
    %v1010 = vand.u32 %v385, 4294901760
    %v1011 = vsub.f32 %v385, %v1010
    %v1012 = vand.u32 %v1011, 4294901760
    %1013 = vmatpush.msra.mxu0 %v1012
    %v1014 = vand.u32 %v384, 4294901760
    %v1015 = vsub.f32 %v384, %v1014
    %v1016 = vand.u32 %v1015, 4294901760
    %1017 = vmatpush.msra.mxu0 %v1016
    %v1018 = vand.u32 %v383, 4294901760
    %v1019 = vsub.f32 %v383, %v1018
    %v1020 = vand.u32 %v1019, 4294901760
    %1021 = vmatpush.msra.mxu0 %v1020
    %v1022 = vand.u32 %v382, 4294901760
    %v1023 = vsub.f32 %v382, %v1022
    %v1024 = vand.u32 %v1023, 4294901760
    %1025 = vmatpush.msra.mxu0 %v1024
    %v1026 = vand.u32 %v381, 4294901760
    %v1027 = vsub.f32 %v381, %v1026
    %v1028 = vand.u32 %v1027, 4294901760
    %1029 = vmatpush.msra.mxu0 %v1028
    %v1030 = vand.u32 %v380, 4294901760
    %v1031 = vsub.f32 %v380, %v1030
    %v1032 = vand.u32 %v1031, 4294901760
    %1033 = vmatpush.msra.mxu0 %v1032
    %v1034 = vand.u32 %v379, 4294901760
    %v1035 = vsub.f32 %v379, %v1034
    %v1036 = vand.u32 %v1035, 4294901760
    %1037 = vmatpush.msra.mxu0 %v1036
    %v1038 = vand.u32 %v378, 4294901760
    %v1039 = vsub.f32 %v378, %v1038
    %v1040 = vand.u32 %v1039, 4294901760
    %1041 = vmatpush.msra.mxu0 %v1040
    %v1042 = vand.u32 %v377, 4294901760
    %v1043 = vsub.f32 %v377, %v1042
    %v1044 = vand.u32 %v1043, 4294901760
    %1045 = vmatpush.msra.mxu0 %v1044
    %v1046 = vand.u32 %v746, 4294901760
    %1047 = vmatmul.f32.gmra.mxu0 %v1046
    %v1048 = vpop.f32.mrf.mxu0
    %v1049 = vadd.f32 %v980, %v1048
    %1050 = vdwg.mxu0
    %v1051 = vand.u32 %v392, 4294901760
    %1052 = vmatpush.msra.mxu0 %v1051
    %v1053 = vand.u32 %v391, 4294901760
    %1054 = vmatpush.msra.mxu0 %v1053
    %v1055 = vand.u32 %v390, 4294901760
    %1056 = vmatpush.msra.mxu0 %v1055
    %v1057 = vand.u32 %v389, 4294901760
    %1058 = vmatpush.msra.mxu0 %v1057
    %v1059 = vand.u32 %v388, 4294901760
    %1060 = vmatpush.msra.mxu0 %v1059
    %v1061 = vand.u32 %v387, 4294901760
    %1062 = vmatpush.msra.mxu0 %v1061
    %v1063 = vand.u32 %v386, 4294901760
    %1064 = vmatpush.msra.mxu0 %v1063
    %v1065 = vand.u32 %v385, 4294901760
    %1066 = vmatpush.msra.mxu0 %v1065
    %v1067 = vand.u32 %v384, 4294901760
    %1068 = vmatpush.msra.mxu0 %v1067
    %v1069 = vand.u32 %v383, 4294901760
    %1070 = vmatpush.msra.mxu0 %v1069
    %v1071 = vand.u32 %v382, 4294901760
    %1072 = vmatpush.msra.mxu0 %v1071
    %v1073 = vand.u32 %v381, 4294901760
    %1074 = vmatpush.msra.mxu0 %v1073
    %v1075 = vand.u32 %v380, 4294901760
    %1076 = vmatpush.msra.mxu0 %v1075
    %v1077 = vand.u32 %v379, 4294901760
    %1078 = vmatpush.msra.mxu0 %v1077
    %v1079 = vand.u32 %v378, 4294901760
    %1080 = vmatpush.msra.mxu0 %v1079
    %v1081 = vand.u32 %v377, 4294901760
    %1082 = vmatpush.msra.mxu0 %v1081
    %v1083 = vand.u32 %v746, 4294901760
    %1084 = vmatmul.f32.gmra.mxu0 %v1083
    %v1085 = vpop.f32.mrf.mxu0
    %v1086 = vadd.f32 %v1049, %v1085
    %1087 = vdwg.mxu0
    %v1088 = vmul.f32 %v732, 0.001953125
    %v1089 = vmul.f32 %v1086, 0.001953125
    %v1090 = vmul.f32 %v1088, %v1088
    %v1091 = vsub.f32 %v1089, %v1090
    %v1092 = vadd.f32 %v1091, 0.001
    %v1093 = vrsqrt.pop %v1092
    %v1094 = vmul.f32 %v1093, %v1092
    %v1095 = vmul.f32 %v1094, %v1093
    %v1096 = vmul.f32 0.5, %v1095
    %v1097 = vsub.f32 1.5, %v1096
    %v1098 = vmul.f32 %v1093, %v1097
    %vm1099 = vweird.f32 %v1092
    %vm1100 = vweird.f32 %v1093
    %vm1101 = vmor %vm1099, %vm1100
    %v1102 = vsel %vm1101, %v1093, %v1098
    %v1103 = vld [vmem:[%s10] sm:$0xff]
    %vm1104 = vcmask 64512
    %v1106 = vsel %vm1104, %v1088, 0
    %1108 = vmatpush.msra.mxu0 0.0
    %1109 = vmatpush.msra.mxu0 0.0
    %1110 = vmatpush.msra.mxu0 0.0
    %1111 = vmatpush.msra.mxu0 0.0
    %1112 = vmatpush.msra.mxu0 0.0
    %1113 = vmatpush.msra.mxu0 0.0
    %1114 = vmatpush.msra.mxu0 0.0
    %1115 = vmatpush.msra.mxu0 0.0
    %1116 = vmatpush.msra.mxu0 0.0
    %1117 = vmatpush.msra.mxu0 0.0
    %1118 = vmatpush.msra.mxu0 0.0
    %1119 = vmatpush.msra.mxu0 0.0
    %1120 = vmatpush.msra.mxu0 0.0
    %1121 = vmatpush.msra.mxu0 0.0
    %1122 = vmatpush.msra.mxu0 0.0
    %v1123 = vand.u32 %v1103, 4294901760
    %1124 = vmatpush.msra.mxu0 %v1123
    %v1125 = vand.u32 %v1106, 4294901760
    %v1126 = vsub.f32 %v1106, %v1125
    %v1127 = vand.u32 %v1126, 4294901760
    %v1128 = vsub.f32 %v1126, %v1127
    %v1129 = vand.u32 %v1128, 4294901760
    %1130 = vmatmul.f32.gmra.mxu0 %v1129
    %v1131 = vpop.f32.mrf.mxu0
    %v1132 = vadd.f32 0.0, %v1131
    %1133 = vdwg.mxu0
    %1134 = vmatpush.msra.mxu0 0.0
    %1135 = vmatpush.msra.mxu0 0.0
    %1136 = vmatpush.msra.mxu0 0.0
    %1137 = vmatpush.msra.mxu0 0.0
    %1138 = vmatpush.msra.mxu0 0.0
    %1139 = vmatpush.msra.mxu0 0.0
    %1140 = vmatpush.msra.mxu0 0.0
    %1141 = vmatpush.msra.mxu0 0.0
    %1142 = vmatpush.msra.mxu0 0.0
    %1143 = vmatpush.msra.mxu0 0.0
    %1144 = vmatpush.msra.mxu0 0.0
    %1145 = vmatpush.msra.mxu0 0.0
    %1146 = vmatpush.msra.mxu0 0.0
    %1147 = vmatpush.msra.mxu0 0.0
    %1148 = vmatpush.msra.mxu0 0.0
    %v1149 = vand.u32 %v1103, 4294901760
    %v1150 = vsub.f32 %v1103, %v1149
    %v1151 = vand.u32 %v1150, 4294901760
    %v1152 = vsub.f32 %v1150, %v1151
    %v1153 = vand.u32 %v1152, 4294901760
    %1154 = vmatpush.msra.mxu0 %v1153
    %v1155 = vand.u32 %v1106, 4294901760
    %1156 = vmatmul.f32.gmra.mxu0 %v1155
    %v1157 = vpop.f32.mrf.mxu0
    %v1158 = vadd.f32 %v1132, %v1157
    %1159 = vdwg.mxu0
    %1160 = vmatpush.msra.mxu0 0.0
    %1161 = vmatpush.msra.mxu0 0.0
    %1162 = vmatpush.msra.mxu0 0.0
    %1163 = vmatpush.msra.mxu0 0.0
    %1164 = vmatpush.msra.mxu0 0.0
    %1165 = vmatpush.msra.mxu0 0.0
    %1166 = vmatpush.msra.mxu0 0.0
    %1167 = vmatpush.msra.mxu0 0.0
    %1168 = vmatpush.msra.mxu0 0.0
    %1169 = vmatpush.msra.mxu0 0.0
    %1170 = vmatpush.msra.mxu0 0.0
    %1171 = vmatpush.msra.mxu0 0.0
    %1172 = vmatpush.msra.mxu0 0.0
    %1173 = vmatpush.msra.mxu0 0.0
    %1174 = vmatpush.msra.mxu0 0.0
    %v1175 = vand.u32 %v1103, 4294901760
    %v1176 = vsub.f32 %v1103, %v1175
    %1177 = vmatpush.msra.mxu0 %v1176
    %v1178 = vand.u32 %v1106, 4294901760
    %v1179 = vsub.f32 %v1106, %v1178
    %1180 = vmatmul.f32.gmra.mxu0 %v1179
    %v1181 = vpop.f32.mrf.mxu0
    %v1182 = vadd.f32 %v1158, %v1181
    %1183 = vdwg.mxu0
    %1184 = vmatpush.msra.mxu0 0.0
    %1185 = vmatpush.msra.mxu0 0.0
    %1186 = vmatpush.msra.mxu0 0.0
    %1187 = vmatpush.msra.mxu0 0.0
    %1188 = vmatpush.msra.mxu0 0.0
    %1189 = vmatpush.msra.mxu0 0.0
    %1190 = vmatpush.msra.mxu0 0.0
    %1191 = vmatpush.msra.mxu0 0.0
    %1192 = vmatpush.msra.mxu0 0.0
    %1193 = vmatpush.msra.mxu0 0.0
    %1194 = vmatpush.msra.mxu0 0.0
    %1195 = vmatpush.msra.mxu0 0.0
    %1196 = vmatpush.msra.mxu0 0.0
    %1197 = vmatpush.msra.mxu0 0.0
    %1198 = vmatpush.msra.mxu0 0.0
    %v1199 = vand.u32 %v1103, 4294901760
    %1200 = vmatpush.msra.mxu0 %v1199
    %v1201 = vand.u32 %v1106, 4294901760
    %v1202 = vsub.f32 %v1106, %v1201
    %v1203 = vand.u32 %v1202, 4294901760
    %1204 = vmatmul.f32.gmra.mxu0 %v1203
    %v1205 = vpop.f32.mrf.mxu0
    %v1206 = vadd.f32 %v1182, %v1205
    %1207 = vdwg.mxu0
    %1208 = vmatpush.msra.mxu0 0.0
    %1209 = vmatpush.msra.mxu0 0.0
    %1210 = vmatpush.msra.mxu0 0.0
    %1211 = vmatpush.msra.mxu0 0.0
    %1212 = vmatpush.msra.mxu0 0.0
    %1213 = vmatpush.msra.mxu0 0.0
    %1214 = vmatpush.msra.mxu0 0.0
    %1215 = vmatpush.msra.mxu0 0.0
    %1216 = vmatpush.msra.mxu0 0.0
    %1217 = vmatpush.msra.mxu0 0.0
    %1218 = vmatpush.msra.mxu0 0.0
    %1219 = vmatpush.msra.mxu0 0.0
    %1220 = vmatpush.msra.mxu0 0.0
    %1221 = vmatpush.msra.mxu0 0.0
    %1222 = vmatpush.msra.mxu0 0.0
    %v1223 = vand.u32 %v1103, 4294901760
    %v1224 = vsub.f32 %v1103, %v1223
    %v1225 = vand.u32 %v1224, 4294901760
    %1226 = vmatpush.msra.mxu0 %v1225
    %v1227 = vand.u32 %v1106, 4294901760
    %1228 = vmatmul.f32.gmra.mxu0 %v1227
    %v1229 = vpop.f32.mrf.mxu0
    %v1230 = vadd.f32 %v1206, %v1229
    %1231 = vdwg.mxu0
    %1232 = vmatpush.msra.mxu0 0.0
    %1233 = vmatpush.msra.mxu0 0.0
    %1234 = vmatpush.msra.mxu0 0.0
    %1235 = vmatpush.msra.mxu0 0.0
    %1236 = vmatpush.msra.mxu0 0.0
    %1237 = vmatpush.msra.mxu0 0.0
    %1238 = vmatpush.msra.mxu0 0.0
    %1239 = vmatpush.msra.mxu0 0.0
    %1240 = vmatpush.msra.mxu0 0.0
    %1241 = vmatpush.msra.mxu0 0.0
    %1242 = vmatpush.msra.mxu0 0.0
    %1243 = vmatpush.msra.mxu0 0.0
    %1244 = vmatpush.msra.mxu0 0.0
    %1245 = vmatpush.msra.mxu0 0.0
    %1246 = vmatpush.msra.mxu0 0.0
    %v1247 = vand.u32 %v1103, 4294901760
    %1248 = vmatpush.msra.mxu0 %v1247
    %v1249 = vand.u32 %v1106, 4294901760
    %1250 = vmatmul.f32.gmra.mxu0 %v1249
    %v1251 = vpop.f32.mrf.mxu0
    %v1252 = vadd.f32 %v1230, %v1251
    %1253 = vdwg.mxu0
    %v1255 = vsel %vm1104, %v1102, 0
    %1257 = vmatpush.msra.mxu0 0.0
    %1258 = vmatpush.msra.mxu0 0.0
    %1259 = vmatpush.msra.mxu0 0.0
    %1260 = vmatpush.msra.mxu0 0.0
    %1261 = vmatpush.msra.mxu0 0.0
    %1262 = vmatpush.msra.mxu0 0.0
    %1263 = vmatpush.msra.mxu0 0.0
    %1264 = vmatpush.msra.mxu0 0.0
    %1265 = vmatpush.msra.mxu0 0.0
    %1266 = vmatpush.msra.mxu0 0.0
    %1267 = vmatpush.msra.mxu0 0.0
    %1268 = vmatpush.msra.mxu0 0.0
    %1269 = vmatpush.msra.mxu0 0.0
    %1270 = vmatpush.msra.mxu0 0.0
    %1271 = vmatpush.msra.mxu0 0.0
    %v1272 = vand.u32 %v1103, 4294901760
    %1273 = vmatpush.msra.mxu0 %v1272
    %v1274 = vand.u32 %v1255, 4294901760
    %v1275 = vsub.f32 %v1255, %v1274
    %v1276 = vand.u32 %v1275, 4294901760
    %v1277 = vsub.f32 %v1275, %v1276
    %v1278 = vand.u32 %v1277, 4294901760
    %1279 = vmatmul.f32.gmra.mxu0 %v1278
    %v1280 = vpop.f32.mrf.mxu0
    %v1281 = vadd.f32 0.0, %v1280
    %1282 = vdwg.mxu0
    %1283 = vmatpush.msra.mxu0 0.0
    %1284 = vmatpush.msra.mxu0 0.0
    %1285 = vmatpush.msra.mxu0 0.0
    %1286 = vmatpush.msra.mxu0 0.0
    %1287 = vmatpush.msra.mxu0 0.0
    %1288 = vmatpush.msra.mxu0 0.0
    %1289 = vmatpush.msra.mxu0 0.0
    %1290 = vmatpush.msra.mxu0 0.0
    %1291 = vmatpush.msra.mxu0 0.0
    %1292 = vmatpush.msra.mxu0 0.0
    %1293 = vmatpush.msra.mxu0 0.0
    %1294 = vmatpush.msra.mxu0 0.0
    %1295 = vmatpush.msra.mxu0 0.0
    %1296 = vmatpush.msra.mxu0 0.0
    %1297 = vmatpush.msra.mxu0 0.0
    %v1298 = vand.u32 %v1103, 4294901760
    %v1299 = vsub.f32 %v1103, %v1298
    %v1300 = vand.u32 %v1299, 4294901760
    %v1301 = vsub.f32 %v1299, %v1300
    %v1302 = vand.u32 %v1301, 4294901760
    %1303 = vmatpush.msra.mxu0 %v1302
    %v1304 = vand.u32 %v1255, 4294901760
    %1305 = vmatmul.f32.gmra.mxu0 %v1304
    %v1306 = vpop.f32.mrf.mxu0
    %v1307 = vadd.f32 %v1281, %v1306
    %1308 = vdwg.mxu0
    %1309 = vmatpush.msra.mxu0 0.0
    %1310 = vmatpush.msra.mxu0 0.0
    %1311 = vmatpush.msra.mxu0 0.0
    %1312 = vmatpush.msra.mxu0 0.0
    %1313 = vmatpush.msra.mxu0 0.0
    %1314 = vmatpush.msra.mxu0 0.0
    %1315 = vmatpush.msra.mxu0 0.0
    %1316 = vmatpush.msra.mxu0 0.0
    %1317 = vmatpush.msra.mxu0 0.0
    %1318 = vmatpush.msra.mxu0 0.0
    %1319 = vmatpush.msra.mxu0 0.0
    %1320 = vmatpush.msra.mxu0 0.0
    %1321 = vmatpush.msra.mxu0 0.0
    %1322 = vmatpush.msra.mxu0 0.0
    %1323 = vmatpush.msra.mxu0 0.0
    %v1324 = vand.u32 %v1103, 4294901760
    %v1325 = vsub.f32 %v1103, %v1324
    %1326 = vmatpush.msra.mxu0 %v1325
    %v1327 = vand.u32 %v1255, 4294901760
    %v1328 = vsub.f32 %v1255, %v1327
    %1329 = vmatmul.f32.gmra.mxu0 %v1328
    %v1330 = vpop.f32.mrf.mxu0
    %v1331 = vadd.f32 %v1307, %v1330
    %1332 = vdwg.mxu0
    %1333 = vmatpush.msra.mxu0 0.0
    %1334 = vmatpush.msra.mxu0 0.0
    %1335 = vmatpush.msra.mxu0 0.0
    %1336 = vmatpush.msra.mxu0 0.0
    %1337 = vmatpush.msra.mxu0 0.0
    %1338 = vmatpush.msra.mxu0 0.0
    %1339 = vmatpush.msra.mxu0 0.0
    %1340 = vmatpush.msra.mxu0 0.0
    %1341 = vmatpush.msra.mxu0 0.0
    %1342 = vmatpush.msra.mxu0 0.0
    %1343 = vmatpush.msra.mxu0 0.0
    %1344 = vmatpush.msra.mxu0 0.0
    %1345 = vmatpush.msra.mxu0 0.0
    %1346 = vmatpush.msra.mxu0 0.0
    %1347 = vmatpush.msra.mxu0 0.0
    %v1348 = vand.u32 %v1103, 4294901760
    %1349 = vmatpush.msra.mxu0 %v1348
    %v1350 = vand.u32 %v1255, 4294901760
    %v1351 = vsub.f32 %v1255, %v1350
    %v1352 = vand.u32 %v1351, 4294901760
    %1353 = vmatmul.f32.gmra.mxu0 %v1352
    %v1354 = vpop.f32.mrf.mxu0
    %v1355 = vadd.f32 %v1331, %v1354
    %1356 = vdwg.mxu0
    %1357 = vmatpush.msra.mxu0 0.0
    %1358 = vmatpush.msra.mxu0 0.0
    %1359 = vmatpush.msra.mxu0 0.0
    %1360 = vmatpush.msra.mxu0 0.0
    %1361 = vmatpush.msra.mxu0 0.0
    %1362 = vmatpush.msra.mxu0 0.0
    %1363 = vmatpush.msra.mxu0 0.0
    %1364 = vmatpush.msra.mxu0 0.0
    %1365 = vmatpush.msra.mxu0 0.0
    %1366 = vmatpush.msra.mxu0 0.0
    %1367 = vmatpush.msra.mxu0 0.0
    %1368 = vmatpush.msra.mxu0 0.0
    %1369 = vmatpush.msra.mxu0 0.0
    %1370 = vmatpush.msra.mxu0 0.0
    %1371 = vmatpush.msra.mxu0 0.0
    %v1372 = vand.u32 %v1103, 4294901760
    %v1373 = vsub.f32 %v1103, %v1372
    %v1374 = vand.u32 %v1373, 4294901760
    %1375 = vmatpush.msra.mxu0 %v1374
    %v1376 = vand.u32 %v1255, 4294901760
    %1377 = vmatmul.f32.gmra.mxu0 %v1376
    %v1378 = vpop.f32.mrf.mxu0
    %v1379 = vadd.f32 %v1355, %v1378
    %1380 = vdwg.mxu0
    %1381 = vmatpush.msra.mxu0 0.0
    %1382 = vmatpush.msra.mxu0 0.0
    %1383 = vmatpush.msra.mxu0 0.0
    %1384 = vmatpush.msra.mxu0 0.0
    %1385 = vmatpush.msra.mxu0 0.0
    %1386 = vmatpush.msra.mxu0 0.0
    %1387 = vmatpush.msra.mxu0 0.0
    %1388 = vmatpush.msra.mxu0 0.0
    %1389 = vmatpush.msra.mxu0 0.0
    %1390 = vmatpush.msra.mxu0 0.0
    %1391 = vmatpush.msra.mxu0 0.0
    %1392 = vmatpush.msra.mxu0 0.0
    %1393 = vmatpush.msra.mxu0 0.0
    %1394 = vmatpush.msra.mxu0 0.0
    %1395 = vmatpush.msra.mxu0 0.0
    %v1396 = vand.u32 %v1103, 4294901760
    %1397 = vmatpush.msra.mxu0 %v1396
    %v1398 = vand.u32 %v1255, 4294901760
    %1399 = vmatmul.f32.gmra.mxu0 %v1398
    %v1400 = vpop.f32.mrf.mxu0
    %v1401 = vadd.f32 %v1379, %v1400
    %1402 = vdwg.mxu0
    %v1403 = vld [vmem:[%s3] sm:$0x1]
    %v1404 = vmul.f32 %v1403, %v1401
    %v1405 = vld [vmem:[%s4] sm:$0x1]
    %v1406 = vmul.f32 %v1252, %v1404
    %v1407 = vsub.f32 %v1405, %v1406
    %v1409 = vperm.slane %v1404, 0
    %v1411 = vmul.f32 %v364, %v1409
    %v1412 = vmul.f32 %v365, %v1409
    %v1413 = vmul.f32 %v366, %v1409
    %v1414 = vmul.f32 %v367, %v1409
    %v1416 = vperm.slane %v1407, 0
    %v1418 = vadd.f32 %v1411, %v1416
    %v1419 = vadd.f32 %v1412, %v1416
    %v1420 = vadd.f32 %v1413, %v1416
    %v1421 = vadd.f32 %v1414, %v1416
    %1422 = vst [vmem:[#allocation2 + $0x1] sm:$0xff] %v1418
    %1423 = vst [vmem:[#allocation2 + $0x9] sm:$0xff] %v1419
    %1424 = vst [vmem:[#allocation2 + $0x19] sm:$0xff] %v1420
    %1425 = vst [vmem:[#allocation2 + $0x21] sm:$0xff] %v1421
    %v1426 = vld [vmem:[#allocation2] sm:$0xff]
    %v1427 = vld [vmem:[#allocation2 + $0x8] sm:$0xff]
    %v1428 = vld [vmem:[#allocation2 + $0x18] sm:$0xff]
    %v1429 = vld [vmem:[#allocation2 + $0x20] sm:$0xff]
    %v1430 = vpack.c.bf16 %v1427, %v1426
    %v1431 = vpack.c.bf16 %v1429, %v1428
    %v1432 = vld [vmem:[#allocation6] sm:$0xf]
    %v1433 = vld [vmem:[#allocation6 + $0x4] sm:$0xf]
    %v1434 = vld [vmem:[#allocation6 + $0x8] sm:$0xf]
    %v1435 = vld [vmem:[#allocation6 + $0xc] sm:$0xf]
    %v1436 = vld [vmem:[#allocation6 + $0x10] sm:$0xf]
    %v1437 = vld [vmem:[#allocation6 + $0x14] sm:$0xf]
    %v1438 = vld [vmem:[#allocation6 + $0x18] sm:$0xf]
    %v1439 = vld [vmem:[#allocation6 + $0x1c] sm:$0xf]
    %v1440 = vld [vmem:[#allocation6 + $0x20] sm:$0xf]
    %v1441 = vld [vmem:[#allocation6 + $0x24] sm:$0xf]
    %v1442 = vld [vmem:[#allocation6 + $0x28] sm:$0xf]
    %v1443 = vld [vmem:[#allocation6 + $0x2c] sm:$0xf]
    %v1444 = vld [vmem:[#allocation6 + $0x30] sm:$0xf]
    %v1445 = vld [vmem:[#allocation6 + $0x34] sm:$0xf]
    %v1446 = vld [vmem:[#allocation6 + $0x38] sm:$0xf]
    %v1447 = vld [vmem:[#allocation6 + $0x3c] sm:$0xf]
    %v1448 = vld [vmem:[#allocation2 + $0x1] sm:$0xff]
    %v1449 = vld [vmem:[#allocation2 + $0x9] sm:$0xff]
    %v1450 = vld [vmem:[#allocation2 + $0x19] sm:$0xff]
    %v1451 = vld [vmem:[#allocation2 + $0x21] sm:$0xff]
    %v1452 = vpack.c.bf16 %v1449, %v1448
    %v1453 = vpack.c.bf16 %v1451, %v1450
    %s1454 = scalar_lea.vmem [#allocation6], 64
    %v1455 = vld [vmem:[%s1454] sm:$0xf]
    %v1456 = vld [vmem:[%s1454 + $0x4] sm:$0xf]
    %v1457 = vld [vmem:[%s1454 + $0x8] sm:$0xf]
    %v1458 = vld [vmem:[%s1454 + $0xc] sm:$0xf]
    %v1459 = vld [vmem:[%s1454 + $0x10] sm:$0xf]
    %v1460 = vld [vmem:[%s1454 + $0x14] sm:$0xf]
    %v1461 = vld [vmem:[%s1454 + $0x18] sm:$0xf]
    %v1462 = vld [vmem:[%s1454 + $0x1c] sm:$0xf]
    %v1463 = vld [vmem:[%s1454 + $0x20] sm:$0xf]
    %v1464 = vld [vmem:[%s1454 + $0x24] sm:$0xf]
    %v1465 = vld [vmem:[%s1454 + $0x28] sm:$0xf]
    %v1466 = vld [vmem:[%s1454 + $0x2c] sm:$0xf]
    %v1467 = vld [vmem:[%s1454 + $0x30] sm:$0xf]
    %v1468 = vld [vmem:[%s1454 + $0x34] sm:$0xf]
    %v1469 = vld [vmem:[%s1454 + $0x38] sm:$0xf]
    %v1470 = vld [vmem:[%s1454 + $0x3c] sm:$0xf]
    %v1487 = vunpack.c.l.b16 %v1455
    %v1488 = vunpack.c.l.b16 %v1456
    %v1489 = vunpack.c.l.b16 %v1457
    %v1490 = vunpack.c.l.b16 %v1458
    %v1491 = vunpack.c.l.b16 %v1459
    %v1492 = vunpack.c.l.b16 %v1460
    %v1493 = vunpack.c.l.b16 %v1461
    %v1494 = vunpack.c.l.b16 %v1462
    %v1495 = vunpack.c.l.b16 %v1463
    %v1496 = vunpack.c.l.b16 %v1464
    %v1497 = vunpack.c.l.b16 %v1465
    %v1498 = vunpack.c.l.b16 %v1466
    %v1499 = vunpack.c.l.b16 %v1467
    %v1500 = vunpack.c.l.b16 %v1468
    %v1501 = vunpack.c.l.b16 %v1469
    %v1502 = vunpack.c.l.b16 %v1470
    %v1503 = vpack.c.b16 %v1488, %v1487
    %v1504 = vpack.c.b16 %v1490, %v1489
    %v1505 = vpack.c.b16 %v1492, %v1491
    %v1506 = vpack.c.b16 %v1494, %v1493
    %v1507 = vpack.c.b16 %v1496, %v1495
    %v1508 = vpack.c.b16 %v1498, %v1497
    %v1509 = vpack.c.b16 %v1500, %v1499
    %v1510 = vpack.c.b16 %v1502, %v1501
    %1519 = vmatpush.bf16.msra.mxu0 %v1510
    %1520 = vmatpush.bf16.msra.mxu0 %v1509
    %1521 = vmatpush.bf16.msra.mxu0 %v1508
    %1522 = vmatpush.bf16.msra.mxu0 %v1507
    %1523 = vmatpush.bf16.msra.mxu0 %v1506
    %1524 = vmatpush.bf16.msra.mxu0 %v1505
    %1525 = vmatpush.bf16.msra.mxu0 %v1504
    %1526 = vmatpush.bf16.msra.mxu0 %v1503
    %1527 = vmatmul.bf16.gmra.mxu0 %v1452
    %v1528 = vpop.f32.mrf.mxu0
    %v1529 = vadd.f32 0.0, %v1528
    %v1530 = vpop.f32.mrf.mxu0
    %v1531 = vadd.f32 0.0, %v1530
    %1532 = vmatmul.bf16.gmra.mxu0 %v1453
    %v1533 = vpop.f32.mrf.mxu0
    %v1534 = vadd.f32 0.0, %v1533
    %v1535 = vpop.f32.mrf.mxu0
    %v1536 = vadd.f32 0.0, %v1535
    %1537 = vdwg.mxu0
    %v1554 = vunpack.c.l.b16 %v1432
    %v1555 = vunpack.c.l.b16 %v1433
    %v1556 = vunpack.c.l.b16 %v1434
    %v1557 = vunpack.c.l.b16 %v1435
    %v1558 = vunpack.c.l.b16 %v1436
    %v1559 = vunpack.c.l.b16 %v1437
    %v1560 = vunpack.c.l.b16 %v1438
    %v1561 = vunpack.c.l.b16 %v1439
    %v1562 = vunpack.c.l.b16 %v1440
    %v1563 = vunpack.c.l.b16 %v1441
    %v1564 = vunpack.c.l.b16 %v1442
    %v1565 = vunpack.c.l.b16 %v1443
    %v1566 = vunpack.c.l.b16 %v1444
    %v1567 = vunpack.c.l.b16 %v1445
    %v1568 = vunpack.c.l.b16 %v1446
    %v1569 = vunpack.c.l.b16 %v1447
    %v1570 = vpack.c.b16 %v1555, %v1554
    %v1571 = vpack.c.b16 %v1557, %v1556
    %v1572 = vpack.c.b16 %v1559, %v1558
    %v1573 = vpack.c.b16 %v1561, %v1560
    %v1574 = vpack.c.b16 %v1563, %v1562
    %v1575 = vpack.c.b16 %v1565, %v1564
    %v1576 = vpack.c.b16 %v1567, %v1566
    %v1577 = vpack.c.b16 %v1569, %v1568
    %1586 = vmatpush.bf16.msra.mxu0 %v1577
    %1587 = vmatpush.bf16.msra.mxu0 %v1576
    %1588 = vmatpush.bf16.msra.mxu0 %v1575
    %1589 = vmatpush.bf16.msra.mxu0 %v1574
    %1590 = vmatpush.bf16.msra.mxu0 %v1573
    %1591 = vmatpush.bf16.msra.mxu0 %v1572
    %1592 = vmatpush.bf16.msra.mxu0 %v1571
    %1593 = vmatpush.bf16.msra.mxu0 %v1570
    %1594 = vmatmul.bf16.gmra.mxu0 %v1430
    %v1595 = vpop.f32.mrf.mxu0
    %v1596 = vadd.f32 %v1529, %v1595
    %v1597 = vpop.f32.mrf.mxu0
    %v1598 = vadd.f32 %v1531, %v1597
    %1599 = vmatmul.bf16.gmra.mxu0 %v1431
    %v1600 = vpop.f32.mrf.mxu0
    %v1601 = vadd.f32 %v1534, %v1600
    %v1602 = vpop.f32.mrf.mxu0
    %v1603 = vadd.f32 %v1536, %v1602
    %1604 = vdwg.mxu0
    %v1605 = vld [vmem:[#allocation2 + $0x2] sm:$0xff]
    %v1606 = vld [vmem:[#allocation2 + $0xa] sm:$0xff]
    %v1607 = vld [vmem:[#allocation2 + $0x1a] sm:$0xff]
    %v1608 = vld [vmem:[#allocation2 + $0x22] sm:$0xff]
    %v1609 = vpack.c.bf16 %v1606, %v1605
    %v1610 = vpack.c.bf16 %v1608, %v1607
    %s1611 = scalar_lea.vmem [#allocation6], 128
    %v1612 = vld [vmem:[%s1611] sm:$0xf]
    %v1613 = vld [vmem:[%s1611 + $0x4] sm:$0xf]
    %v1614 = vld [vmem:[%s1611 + $0x8] sm:$0xf]
    %v1615 = vld [vmem:[%s1611 + $0xc] sm:$0xf]
    %v1616 = vld [vmem:[%s1611 + $0x10] sm:$0xf]
    %v1617 = vld [vmem:[%s1611 + $0x14] sm:$0xf]
    %v1618 = vld [vmem:[%s1611 + $0x18] sm:$0xf]
    %v1619 = vld [vmem:[%s1611 + $0x1c] sm:$0xf]
    %v1620 = vld [vmem:[%s1611 + $0x20] sm:$0xf]
    %v1621 = vld [vmem:[%s1611 + $0x24] sm:$0xf]
    %v1622 = vld [vmem:[%s1611 + $0x28] sm:$0xf]
    %v1623 = vld [vmem:[%s1611 + $0x2c] sm:$0xf]
    %v1624 = vld [vmem:[%s1611 + $0x30] sm:$0xf]
    %v1625 = vld [vmem:[%s1611 + $0x34] sm:$0xf]
    %v1626 = vld [vmem:[%s1611 + $0x38] sm:$0xf]
    %v1627 = vld [vmem:[%s1611 + $0x3c] sm:$0xf]
    %v1644 = vunpack.c.l.b16 %v1612
    %v1645 = vunpack.c.l.b16 %v1613
    %v1646 = vunpack.c.l.b16 %v1614
    %v1647 = vunpack.c.l.b16 %v1615
    %v1648 = vunpack.c.l.b16 %v1616
    %v1649 = vunpack.c.l.b16 %v1617
    %v1650 = vunpack.c.l.b16 %v1618
    %v1651 = vunpack.c.l.b16 %v1619
    %v1652 = vunpack.c.l.b16 %v1620
    %v1653 = vunpack.c.l.b16 %v1621
    %v1654 = vunpack.c.l.b16 %v1622
    %v1655 = vunpack.c.l.b16 %v1623
    %v1656 = vunpack.c.l.b16 %v1624
    %v1657 = vunpack.c.l.b16 %v1625
    %v1658 = vunpack.c.l.b16 %v1626
    %v1659 = vunpack.c.l.b16 %v1627
    %v1660 = vpack.c.b16 %v1645, %v1644
    %v1661 = vpack.c.b16 %v1647, %v1646
    %v1662 = vpack.c.b16 %v1649, %v1648
    %v1663 = vpack.c.b16 %v1651, %v1650
    %v1664 = vpack.c.b16 %v1653, %v1652
    %v1665 = vpack.c.b16 %v1655, %v1654
    %v1666 = vpack.c.b16 %v1657, %v1656
    %v1667 = vpack.c.b16 %v1659, %v1658
    %1676 = vmatpush.bf16.msra.mxu0 %v1667
    %1677 = vmatpush.bf16.msra.mxu0 %v1666
    %1678 = vmatpush.bf16.msra.mxu0 %v1665
    %1679 = vmatpush.bf16.msra.mxu0 %v1664
    %1680 = vmatpush.bf16.msra.mxu0 %v1663
    %1681 = vmatpush.bf16.msra.mxu0 %v1662
    %1682 = vmatpush.bf16.msra.mxu0 %v1661
    %1683 = vmatpush.bf16.msra.mxu0 %v1660
    %1684 = vmatmul.bf16.gmra.mxu0 %v1609
    %v1685 = vpop.f32.mrf.mxu0
    %v1686 = vadd.f32 0.0, %v1685
    %v1687 = vpop.f32.mrf.mxu0
    %v1688 = vadd.f32 0.0, %v1687
    %1689 = vmatmul.bf16.gmra.mxu0 %v1610
    %v1690 = vpop.f32.mrf.mxu0
    %v1691 = vadd.f32 0.0, %v1690
    %v1692 = vpop.f32.mrf.mxu0
    %v1693 = vadd.f32 0.0, %v1692
    %1694 = vdwg.mxu0
    %v1695 = vadd.f32 %v1596, %v1686
    %v1696 = vadd.f32 %v1598, %v1688
    %v1697 = vadd.f32 %v1601, %v1691
    %v1698 = vadd.f32 %v1603, %v1693
    %v1699 = vld [vmem:[%s6] sm:$0x1]
    %v1701 = vperm.slane %v1699, 0
    %v1703 = vadd.f32 %v1695, %v1701
    %v1704 = vadd.f32 %v1696, %v1701
    %v1705 = vadd.f32 %v1697, %v1701
    %v1706 = vadd.f32 %v1698, %v1701
    %v1707 = vmax.f32 %v1703, 0.0
    %v1708 = vmax.f32 %v1704, 0.0
    %v1709 = vmax.f32 %v1705, 0.0
    %v1710 = vmax.f32 %v1706, 0.0
    %v1711 = vadd.f32 %v1707, %v1708
    %v1712 = vadd.f32 %v1711, %v1709
    %v1713 = vadd.f32 %v1712, %v1710
    %v1714 = vrot.slane %v1713, 4
    %v1715 = vadd.f32 %v1713, %v1714
    %v1716 = vrot.slane %v1715, 2
    %v1717 = vadd.f32 %v1715, %v1716
    %v1718 = vrot.slane %v1717, 1
    %v1719 = vadd.f32 %v1717, %v1718
    %v1720 = vld [vmem:[%s9] sm:$0xff]
    %v1721 = vld [vmem:[%s9 + $0x8] sm:$0xff]
    %v1722 = vld [vmem:[%s9 + $0x10] sm:$0xff]
    %v1723 = vld [vmem:[%s9 + $0x18] sm:$0xff]
    %v1724 = vld [vmem:[%s9 + $0x20] sm:$0xff]
    %v1725 = vld [vmem:[%s9 + $0x28] sm:$0xff]
    %v1726 = vld [vmem:[%s9 + $0x30] sm:$0xff]
    %v1727 = vld [vmem:[%s9 + $0x38] sm:$0xff]
    %v1728 = vld [vmem:[%s9 + $0x40] sm:$0xff]
    %v1729 = vld [vmem:[%s9 + $0x48] sm:$0xff]
    %v1730 = vld [vmem:[%s9 + $0x50] sm:$0xff]
    %v1731 = vld [vmem:[%s9 + $0x58] sm:$0xff]
    %v1732 = vld [vmem:[%s9 + $0x60] sm:$0xff]
    %v1733 = vld [vmem:[%s9 + $0x68] sm:$0xff]
    %v1734 = vld [vmem:[%s9 + $0x70] sm:$0xff]
    %v1735 = vld [vmem:[%s9 + $0x78] sm:$0xff]
    %v1736 = vand.u32 %v1735, 4294901760
    %1737 = vmatpush.msra.mxu0 %v1736
    %v1738 = vand.u32 %v1734, 4294901760
    %1739 = vmatpush.msra.mxu0 %v1738
    %v1740 = vand.u32 %v1733, 4294901760
    %1741 = vmatpush.msra.mxu0 %v1740
    %v1742 = vand.u32 %v1732, 4294901760
    %1743 = vmatpush.msra.mxu0 %v1742
    %v1744 = vand.u32 %v1731, 4294901760
    %1745 = vmatpush.msra.mxu0 %v1744
    %v1746 = vand.u32 %v1730, 4294901760
    %1747 = vmatpush.msra.mxu0 %v1746
    %v1748 = vand.u32 %v1729, 4294901760
    %1749 = vmatpush.msra.mxu0 %v1748
    %v1750 = vand.u32 %v1728, 4294901760
    %1751 = vmatpush.msra.mxu0 %v1750
    %v1752 = vand.u32 %v1727, 4294901760
    %1753 = vmatpush.msra.mxu0 %v1752
    %v1754 = vand.u32 %v1726, 4294901760
    %1755 = vmatpush.msra.mxu0 %v1754
    %v1756 = vand.u32 %v1725, 4294901760
    %1757 = vmatpush.msra.mxu0 %v1756
    %v1758 = vand.u32 %v1724, 4294901760
    %1759 = vmatpush.msra.mxu0 %v1758
    %v1760 = vand.u32 %v1723, 4294901760
    %1761 = vmatpush.msra.mxu0 %v1760
    %v1762 = vand.u32 %v1722, 4294901760
    %1763 = vmatpush.msra.mxu0 %v1762
    %v1764 = vand.u32 %v1721, 4294901760
    %1765 = vmatpush.msra.mxu0 %v1764
    %v1766 = vand.u32 %v1720, 4294901760
    %1767 = vmatpush.msra.mxu0 %v1766
    %v1768 = vand.u32 %v1719, 4294901760
    %v1769 = vsub.f32 %v1719, %v1768
    %v1770 = vand.u32 %v1769, 4294901760
    %v1771 = vsub.f32 %v1769, %v1770
    %v1772 = vand.u32 %v1771, 4294901760
    %1773 = vmatmul.f32.gmra.mxu0 %v1772
    %v1774 = vpop.f32.mrf.mxu0
    %v1775 = vadd.f32 0.0, %v1774
    %1776 = vdwg.mxu0
    %v1777 = vand.u32 %v1735, 4294901760
    %v1778 = vsub.f32 %v1735, %v1777
    %v1779 = vand.u32 %v1778, 4294901760
    %v1780 = vsub.f32 %v1778, %v1779
    %v1781 = vand.u32 %v1780, 4294901760
    %1782 = vmatpush.msra.mxu0 %v1781
    %v1783 = vand.u32 %v1734, 4294901760
    %v1784 = vsub.f32 %v1734, %v1783
    %v1785 = vand.u32 %v1784, 4294901760
    %v1786 = vsub.f32 %v1784, %v1785
    %v1787 = vand.u32 %v1786, 4294901760
    %1788 = vmatpush.msra.mxu0 %v1787
    %v1789 = vand.u32 %v1733, 4294901760
    %v1790 = vsub.f32 %v1733, %v1789
    %v1791 = vand.u32 %v1790, 4294901760
    %v1792 = vsub.f32 %v1790, %v1791
    %v1793 = vand.u32 %v1792, 4294901760
    %1794 = vmatpush.msra.mxu0 %v1793
    %v1795 = vand.u32 %v1732, 4294901760
    %v1796 = vsub.f32 %v1732, %v1795
    %v1797 = vand.u32 %v1796, 4294901760
    %v1798 = vsub.f32 %v1796, %v1797
    %v1799 = vand.u32 %v1798, 4294901760
    %1800 = vmatpush.msra.mxu0 %v1799
    %v1801 = vand.u32 %v1731, 4294901760
    %v1802 = vsub.f32 %v1731, %v1801
    %v1803 = vand.u32 %v1802, 4294901760
    %v1804 = vsub.f32 %v1802, %v1803
    %v1805 = vand.u32 %v1804, 4294901760
    %1806 = vmatpush.msra.mxu0 %v1805
    %v1807 = vand.u32 %v1730, 4294901760
    %v1808 = vsub.f32 %v1730, %v1807
    %v1809 = vand.u32 %v1808, 4294901760
    %v1810 = vsub.f32 %v1808, %v1809
    %v1811 = vand.u32 %v1810, 4294901760
    %1812 = vmatpush.msra.mxu0 %v1811
    %v1813 = vand.u32 %v1729, 4294901760
    %v1814 = vsub.f32 %v1729, %v1813
    %v1815 = vand.u32 %v1814, 4294901760
    %v1816 = vsub.f32 %v1814, %v1815
    %v1817 = vand.u32 %v1816, 4294901760
    %1818 = vmatpush.msra.mxu0 %v1817
    %v1819 = vand.u32 %v1728, 4294901760
    %v1820 = vsub.f32 %v1728, %v1819
    %v1821 = vand.u32 %v1820, 4294901760
    %v1822 = vsub.f32 %v1820, %v1821
    %v1823 = vand.u32 %v1822, 4294901760
    %1824 = vmatpush.msra.mxu0 %v1823
    %v1825 = vand.u32 %v1727, 4294901760
    %v1826 = vsub.f32 %v1727, %v1825
    %v1827 = vand.u32 %v1826, 4294901760
    %v1828 = vsub.f32 %v1826, %v1827
    %v1829 = vand.u32 %v1828, 4294901760
    %1830 = vmatpush.msra.mxu0 %v1829
    %v1831 = vand.u32 %v1726, 4294901760
    %v1832 = vsub.f32 %v1726, %v1831
    %v1833 = vand.u32 %v1832, 4294901760
    %v1834 = vsub.f32 %v1832, %v1833
    %v1835 = vand.u32 %v1834, 4294901760
    %1836 = vmatpush.msra.mxu0 %v1835
    %v1837 = vand.u32 %v1725, 4294901760
    %v1838 = vsub.f32 %v1725, %v1837
    %v1839 = vand.u32 %v1838, 4294901760
    %v1840 = vsub.f32 %v1838, %v1839
    %v1841 = vand.u32 %v1840, 4294901760
    %1842 = vmatpush.msra.mxu0 %v1841
    %v1843 = vand.u32 %v1724, 4294901760
    %v1844 = vsub.f32 %v1724, %v1843
    %v1845 = vand.u32 %v1844, 4294901760
    %v1846 = vsub.f32 %v1844, %v1845
    %v1847 = vand.u32 %v1846, 4294901760
    %1848 = vmatpush.msra.mxu0 %v1847
    %v1849 = vand.u32 %v1723, 4294901760
    %v1850 = vsub.f32 %v1723, %v1849
    %v1851 = vand.u32 %v1850, 4294901760
    %v1852 = vsub.f32 %v1850, %v1851
    %v1853 = vand.u32 %v1852, 4294901760
    %1854 = vmatpush.msra.mxu0 %v1853
    %v1855 = vand.u32 %v1722, 4294901760
    %v1856 = vsub.f32 %v1722, %v1855
    %v1857 = vand.u32 %v1856, 4294901760
    %v1858 = vsub.f32 %v1856, %v1857
    %v1859 = vand.u32 %v1858, 4294901760
    %1860 = vmatpush.msra.mxu0 %v1859
    %v1861 = vand.u32 %v1721, 4294901760
    %v1862 = vsub.f32 %v1721, %v1861
    %v1863 = vand.u32 %v1862, 4294901760
    %v1864 = vsub.f32 %v1862, %v1863
    %v1865 = vand.u32 %v1864, 4294901760
    %1866 = vmatpush.msra.mxu0 %v1865
    %v1867 = vand.u32 %v1720, 4294901760
    %v1868 = vsub.f32 %v1720, %v1867
    %v1869 = vand.u32 %v1868, 4294901760
    %v1870 = vsub.f32 %v1868, %v1869
    %v1871 = vand.u32 %v1870, 4294901760
    %1872 = vmatpush.msra.mxu0 %v1871
    %v1873 = vand.u32 %v1719, 4294901760
    %1874 = vmatmul.f32.gmra.mxu0 %v1873
    %v1875 = vpop.f32.mrf.mxu0
    %v1876 = vadd.f32 %v1775, %v1875
    %1877 = vdwg.mxu0
    %v1878 = vand.u32 %v1735, 4294901760
    %v1879 = vsub.f32 %v1735, %v1878
    %1880 = vmatpush.msra.mxu0 %v1879
    %v1881 = vand.u32 %v1734, 4294901760
    %v1882 = vsub.f32 %v1734, %v1881
    %1883 = vmatpush.msra.mxu0 %v1882
    %v1884 = vand.u32 %v1733, 4294901760
    %v1885 = vsub.f32 %v1733, %v1884
    %1886 = vmatpush.msra.mxu0 %v1885
    %v1887 = vand.u32 %v1732, 4294901760
    %v1888 = vsub.f32 %v1732, %v1887
    %1889 = vmatpush.msra.mxu0 %v1888
    %v1890 = vand.u32 %v1731, 4294901760
    %v1891 = vsub.f32 %v1731, %v1890
    %1892 = vmatpush.msra.mxu0 %v1891
    %v1893 = vand.u32 %v1730, 4294901760
    %v1894 = vsub.f32 %v1730, %v1893
    %1895 = vmatpush.msra.mxu0 %v1894
    %v1896 = vand.u32 %v1729, 4294901760
    %v1897 = vsub.f32 %v1729, %v1896
    %1898 = vmatpush.msra.mxu0 %v1897
    %v1899 = vand.u32 %v1728, 4294901760
    %v1900 = vsub.f32 %v1728, %v1899
    %1901 = vmatpush.msra.mxu0 %v1900
    %v1902 = vand.u32 %v1727, 4294901760
    %v1903 = vsub.f32 %v1727, %v1902
    %1904 = vmatpush.msra.mxu0 %v1903
    %v1905 = vand.u32 %v1726, 4294901760
    %v1906 = vsub.f32 %v1726, %v1905
    %1907 = vmatpush.msra.mxu0 %v1906
    %v1908 = vand.u32 %v1725, 4294901760
    %v1909 = vsub.f32 %v1725, %v1908
    %1910 = vmatpush.msra.mxu0 %v1909
    %v1911 = vand.u32 %v1724, 4294901760
    %v1912 = vsub.f32 %v1724, %v1911
    %1913 = vmatpush.msra.mxu0 %v1912
    %v1914 = vand.u32 %v1723, 4294901760
    %v1915 = vsub.f32 %v1723, %v1914
    %1916 = vmatpush.msra.mxu0 %v1915
    %v1917 = vand.u32 %v1722, 4294901760
    %v1918 = vsub.f32 %v1722, %v1917
    %1919 = vmatpush.msra.mxu0 %v1918
    %v1920 = vand.u32 %v1721, 4294901760
    %v1921 = vsub.f32 %v1721, %v1920
    %1922 = vmatpush.msra.mxu0 %v1921
    %v1923 = vand.u32 %v1720, 4294901760
    %v1924 = vsub.f32 %v1720, %v1923
    %1925 = vmatpush.msra.mxu0 %v1924
    %v1926 = vand.u32 %v1719, 4294901760
    %v1927 = vsub.f32 %v1719, %v1926
    %1928 = vmatmul.f32.gmra.mxu0 %v1927
    %v1929 = vpop.f32.mrf.mxu0
    %v1930 = vadd.f32 %v1876, %v1929
    %1931 = vdwg.mxu0
    %v1932 = vand.u32 %v1735, 4294901760
    %1933 = vmatpush.msra.mxu0 %v1932
    %v1934 = vand.u32 %v1734, 4294901760
    %1935 = vmatpush.msra.mxu0 %v1934
    %v1936 = vand.u32 %v1733, 4294901760
    %1937 = vmatpush.msra.mxu0 %v1936
    %v1938 = vand.u32 %v1732, 4294901760
    %1939 = vmatpush.msra.mxu0 %v1938
    %v1940 = vand.u32 %v1731, 4294901760
    %1941 = vmatpush.msra.mxu0 %v1940
    %v1942 = vand.u32 %v1730, 4294901760
    %1943 = vmatpush.msra.mxu0 %v1942
    %v1944 = vand.u32 %v1729, 4294901760
    %1945 = vmatpush.msra.mxu0 %v1944
    %v1946 = vand.u32 %v1728, 4294901760
    %1947 = vmatpush.msra.mxu0 %v1946
    %v1948 = vand.u32 %v1727, 4294901760
    %1949 = vmatpush.msra.mxu0 %v1948
    %v1950 = vand.u32 %v1726, 4294901760
    %1951 = vmatpush.msra.mxu0 %v1950
    %v1952 = vand.u32 %v1725, 4294901760
    %1953 = vmatpush.msra.mxu0 %v1952
    %v1954 = vand.u32 %v1724, 4294901760
    %1955 = vmatpush.msra.mxu0 %v1954
    %v1956 = vand.u32 %v1723, 4294901760
    %1957 = vmatpush.msra.mxu0 %v1956
    %v1958 = vand.u32 %v1722, 4294901760
    %1959 = vmatpush.msra.mxu0 %v1958
    %v1960 = vand.u32 %v1721, 4294901760
    %1961 = vmatpush.msra.mxu0 %v1960
    %v1962 = vand.u32 %v1720, 4294901760
    %1963 = vmatpush.msra.mxu0 %v1962
    %v1964 = vand.u32 %v1719, 4294901760
    %v1965 = vsub.f32 %v1719, %v1964
    %v1966 = vand.u32 %v1965, 4294901760
    %1967 = vmatmul.f32.gmra.mxu0 %v1966
    %v1968 = vpop.f32.mrf.mxu0
    %v1969 = vadd.f32 %v1930, %v1968
    %1970 = vdwg.mxu0
    %v1971 = vand.u32 %v1735, 4294901760
    %v1972 = vsub.f32 %v1735, %v1971
    %v1973 = vand.u32 %v1972, 4294901760
    %1974 = vmatpush.msra.mxu0 %v1973
    %v1975 = vand.u32 %v1734, 4294901760
    %v1976 = vsub.f32 %v1734, %v1975
    %v1977 = vand.u32 %v1976, 4294901760
    %1978 = vmatpush.msra.mxu0 %v1977
    %v1979 = vand.u32 %v1733, 4294901760
    %v1980 = vsub.f32 %v1733, %v1979
    %v1981 = vand.u32 %v1980, 4294901760
    %1982 = vmatpush.msra.mxu0 %v1981
    %v1983 = vand.u32 %v1732, 4294901760
    %v1984 = vsub.f32 %v1732, %v1983
    %v1985 = vand.u32 %v1984, 4294901760
    %1986 = vmatpush.msra.mxu0 %v1985
    %v1987 = vand.u32 %v1731, 4294901760
    %v1988 = vsub.f32 %v1731, %v1987
    %v1989 = vand.u32 %v1988, 4294901760
    %1990 = vmatpush.msra.mxu0 %v1989
    %v1991 = vand.u32 %v1730, 4294901760
    %v1992 = vsub.f32 %v1730, %v1991
    %v1993 = vand.u32 %v1992, 4294901760
    %1994 = vmatpush.msra.mxu0 %v1993
    %v1995 = vand.u32 %v1729, 4294901760
    %v1996 = vsub.f32 %v1729, %v1995
    %v1997 = vand.u32 %v1996, 4294901760
    %1998 = vmatpush.msra.mxu0 %v1997
    %v1999 = vand.u32 %v1728, 4294901760
    %v2000 = vsub.f32 %v1728, %v1999
    %v2001 = vand.u32 %v2000, 4294901760
    %2002 = vmatpush.msra.mxu0 %v2001
    %v2003 = vand.u32 %v1727, 4294901760
    %v2004 = vsub.f32 %v1727, %v2003
    %v2005 = vand.u32 %v2004, 4294901760
    %2006 = vmatpush.msra.mxu0 %v2005
    %v2007 = vand.u32 %v1726, 4294901760
    %v2008 = vsub.f32 %v1726, %v2007
    %v2009 = vand.u32 %v2008, 4294901760
    %2010 = vmatpush.msra.mxu0 %v2009
    %v2011 = vand.u32 %v1725, 4294901760
    %v2012 = vsub.f32 %v1725, %v2011
    %v2013 = vand.u32 %v2012, 4294901760
    %2014 = vmatpush.msra.mxu0 %v2013
    %v2015 = vand.u32 %v1724, 4294901760
    %v2016 = vsub.f32 %v1724, %v2015
    %v2017 = vand.u32 %v2016, 4294901760
    %2018 = vmatpush.msra.mxu0 %v2017
    %v2019 = vand.u32 %v1723, 4294901760
    %v2020 = vsub.f32 %v1723, %v2019
    %v2021 = vand.u32 %v2020, 4294901760
    %2022 = vmatpush.msra.mxu0 %v2021
    %v2023 = vand.u32 %v1722, 4294901760
    %v2024 = vsub.f32 %v1722, %v2023
    %v2025 = vand.u32 %v2024, 4294901760
    %2026 = vmatpush.msra.mxu0 %v2025
    %v2027 = vand.u32 %v1721, 4294901760
    %v2028 = vsub.f32 %v1721, %v2027
    %v2029 = vand.u32 %v2028, 4294901760
    %2030 = vmatpush.msra.mxu0 %v2029
    %v2031 = vand.u32 %v1720, 4294901760
    %v2032 = vsub.f32 %v1720, %v2031
    %v2033 = vand.u32 %v2032, 4294901760
    %2034 = vmatpush.msra.mxu0 %v2033
    %v2035 = vand.u32 %v1719, 4294901760
    %2036 = vmatmul.f32.gmra.mxu0 %v2035
    %v2037 = vpop.f32.mrf.mxu0
    %v2038 = vadd.f32 %v1969, %v2037
    %2039 = vdwg.mxu0
    %v2040 = vand.u32 %v1735, 4294901760
    %2041 = vmatpush.msra.mxu0 %v2040
    %v2042 = vand.u32 %v1734, 4294901760
    %2043 = vmatpush.msra.mxu0 %v2042
    %v2044 = vand.u32 %v1733, 4294901760
    %2045 = vmatpush.msra.mxu0 %v2044
    %v2046 = vand.u32 %v1732, 4294901760
    %2047 = vmatpush.msra.mxu0 %v2046
    %v2048 = vand.u32 %v1731, 4294901760
    %2049 = vmatpush.msra.mxu0 %v2048
    %v2050 = vand.u32 %v1730, 4294901760
    %2051 = vmatpush.msra.mxu0 %v2050
    %v2052 = vand.u32 %v1729, 4294901760
    %2053 = vmatpush.msra.mxu0 %v2052
    %v2054 = vand.u32 %v1728, 4294901760
    %2055 = vmatpush.msra.mxu0 %v2054
    %v2056 = vand.u32 %v1727, 4294901760
    %2057 = vmatpush.msra.mxu0 %v2056
    %v2058 = vand.u32 %v1726, 4294901760
    %2059 = vmatpush.msra.mxu0 %v2058
    %v2060 = vand.u32 %v1725, 4294901760
    %2061 = vmatpush.msra.mxu0 %v2060
    %v2062 = vand.u32 %v1724, 4294901760
    %2063 = vmatpush.msra.mxu0 %v2062
    %v2064 = vand.u32 %v1723, 4294901760
    %2065 = vmatpush.msra.mxu0 %v2064
    %v2066 = vand.u32 %v1722, 4294901760
    %2067 = vmatpush.msra.mxu0 %v2066
    %v2068 = vand.u32 %v1721, 4294901760
    %2069 = vmatpush.msra.mxu0 %v2068
    %v2070 = vand.u32 %v1720, 4294901760
    %2071 = vmatpush.msra.mxu0 %v2070
    %v2072 = vand.u32 %v1719, 4294901760
    %2073 = vmatmul.f32.gmra.mxu0 %v2072
    %v2074 = vpop.f32.mrf.mxu0
    %v2075 = vadd.f32 %v2038, %v2074
    %2076 = vdwg.mxu0
    %v2077 = vmul.f32 %v1707, %v1707
    %v2078 = vmul.f32 %v1708, %v1708
    %v2079 = vmul.f32 %v1709, %v1709
    %v2080 = vmul.f32 %v1710, %v1710
    %v2081 = vadd.f32 %v2077, %v2078
    %v2082 = vadd.f32 %v2081, %v2079
    %v2083 = vadd.f32 %v2082, %v2080
    %v2084 = vrot.slane %v2083, 4
    %v2085 = vadd.f32 %v2083, %v2084
    %v2086 = vrot.slane %v2085, 2
    %v2087 = vadd.f32 %v2085, %v2086
    %v2088 = vrot.slane %v2087, 1
    %v2089 = vadd.f32 %v2087, %v2088
    %v2090 = vand.u32 %v1735, 4294901760
    %2091 = vmatpush.msra.mxu0 %v2090
    %v2092 = vand.u32 %v1734, 4294901760
    %2093 = vmatpush.msra.mxu0 %v2092
    %v2094 = vand.u32 %v1733, 4294901760
    %2095 = vmatpush.msra.mxu0 %v2094
    %v2096 = vand.u32 %v1732, 4294901760
    %2097 = vmatpush.msra.mxu0 %v2096
    %v2098 = vand.u32 %v1731, 4294901760
    %2099 = vmatpush.msra.mxu0 %v2098
    %v2100 = vand.u32 %v1730, 4294901760
    %2101 = vmatpush.msra.mxu0 %v2100
    %v2102 = vand.u32 %v1729, 4294901760
    %2103 = vmatpush.msra.mxu0 %v2102
    %v2104 = vand.u32 %v1728, 4294901760
    %2105 = vmatpush.msra.mxu0 %v2104
    %v2106 = vand.u32 %v1727, 4294901760
    %2107 = vmatpush.msra.mxu0 %v2106
    %v2108 = vand.u32 %v1726, 4294901760
    %2109 = vmatpush.msra.mxu0 %v2108
    %v2110 = vand.u32 %v1725, 4294901760
    %2111 = vmatpush.msra.mxu0 %v2110
    %v2112 = vand.u32 %v1724, 4294901760
    %2113 = vmatpush.msra.mxu0 %v2112
    %v2114 = vand.u32 %v1723, 4294901760
    %2115 = vmatpush.msra.mxu0 %v2114
    %v2116 = vand.u32 %v1722, 4294901760
    %2117 = vmatpush.msra.mxu0 %v2116
    %v2118 = vand.u32 %v1721, 4294901760
    %2119 = vmatpush.msra.mxu0 %v2118
    %v2120 = vand.u32 %v1720, 4294901760
    %2121 = vmatpush.msra.mxu0 %v2120
    %v2122 = vand.u32 %v2089, 4294901760
    %v2123 = vsub.f32 %v2089, %v2122
    %v2124 = vand.u32 %v2123, 4294901760
    %v2125 = vsub.f32 %v2123, %v2124
    %v2126 = vand.u32 %v2125, 4294901760
    %2127 = vmatmul.f32.gmra.mxu0 %v2126
    %v2128 = vpop.f32.mrf.mxu0
    %v2129 = vadd.f32 0.0, %v2128
    %2130 = vdwg.mxu0
    %v2131 = vand.u32 %v1735, 4294901760
    %v2132 = vsub.f32 %v1735, %v2131
    %v2133 = vand.u32 %v2132, 4294901760
    %v2134 = vsub.f32 %v2132, %v2133
    %v2135 = vand.u32 %v2134, 4294901760
    %2136 = vmatpush.msra.mxu0 %v2135
    %v2137 = vand.u32 %v1734, 4294901760
    %v2138 = vsub.f32 %v1734, %v2137
    %v2139 = vand.u32 %v2138, 4294901760
    %v2140 = vsub.f32 %v2138, %v2139
    %v2141 = vand.u32 %v2140, 4294901760
    %2142 = vmatpush.msra.mxu0 %v2141
    %v2143 = vand.u32 %v1733, 4294901760
    %v2144 = vsub.f32 %v1733, %v2143
    %v2145 = vand.u32 %v2144, 4294901760
    %v2146 = vsub.f32 %v2144, %v2145
    %v2147 = vand.u32 %v2146, 4294901760
    %2148 = vmatpush.msra.mxu0 %v2147
    %v2149 = vand.u32 %v1732, 4294901760
    %v2150 = vsub.f32 %v1732, %v2149
    %v2151 = vand.u32 %v2150, 4294901760
    %v2152 = vsub.f32 %v2150, %v2151
    %v2153 = vand.u32 %v2152, 4294901760
    %2154 = vmatpush.msra.mxu0 %v2153
    %v2155 = vand.u32 %v1731, 4294901760
    %v2156 = vsub.f32 %v1731, %v2155
    %v2157 = vand.u32 %v2156, 4294901760
    %v2158 = vsub.f32 %v2156, %v2157
    %v2159 = vand.u32 %v2158, 4294901760
    %2160 = vmatpush.msra.mxu0 %v2159
    %v2161 = vand.u32 %v1730, 4294901760
    %v2162 = vsub.f32 %v1730, %v2161
    %v2163 = vand.u32 %v2162, 4294901760
    %v2164 = vsub.f32 %v2162, %v2163
    %v2165 = vand.u32 %v2164, 4294901760
    %2166 = vmatpush.msra.mxu0 %v2165
    %v2167 = vand.u32 %v1729, 4294901760
    %v2168 = vsub.f32 %v1729, %v2167
    %v2169 = vand.u32 %v2168, 4294901760
    %v2170 = vsub.f32 %v2168, %v2169
    %v2171 = vand.u32 %v2170, 4294901760
    %2172 = vmatpush.msra.mxu0 %v2171
    %v2173 = vand.u32 %v1728, 4294901760
    %v2174 = vsub.f32 %v1728, %v2173
    %v2175 = vand.u32 %v2174, 4294901760
    %v2176 = vsub.f32 %v2174, %v2175
    %v2177 = vand.u32 %v2176, 4294901760
    %2178 = vmatpush.msra.mxu0 %v2177
    %v2179 = vand.u32 %v1727, 4294901760
    %v2180 = vsub.f32 %v1727, %v2179
    %v2181 = vand.u32 %v2180, 4294901760
    %v2182 = vsub.f32 %v2180, %v2181
    %v2183 = vand.u32 %v2182, 4294901760
    %2184 = vmatpush.msra.mxu0 %v2183
    %v2185 = vand.u32 %v1726, 4294901760
    %v2186 = vsub.f32 %v1726, %v2185
    %v2187 = vand.u32 %v2186, 4294901760
    %v2188 = vsub.f32 %v2186, %v2187
    %v2189 = vand.u32 %v2188, 4294901760
    %2190 = vmatpush.msra.mxu0 %v2189
    %v2191 = vand.u32 %v1725, 4294901760
    %v2192 = vsub.f32 %v1725, %v2191
    %v2193 = vand.u32 %v2192, 4294901760
    %v2194 = vsub.f32 %v2192, %v2193
    %v2195 = vand.u32 %v2194, 4294901760
    %2196 = vmatpush.msra.mxu0 %v2195
    %v2197 = vand.u32 %v1724, 4294901760
    %v2198 = vsub.f32 %v1724, %v2197
    %v2199 = vand.u32 %v2198, 4294901760
    %v2200 = vsub.f32 %v2198, %v2199
    %v2201 = vand.u32 %v2200, 4294901760
    %2202 = vmatpush.msra.mxu0 %v2201
    %v2203 = vand.u32 %v1723, 4294901760
    %v2204 = vsub.f32 %v1723, %v2203
    %v2205 = vand.u32 %v2204, 4294901760
    %v2206 = vsub.f32 %v2204, %v2205
    %v2207 = vand.u32 %v2206, 4294901760
    %2208 = vmatpush.msra.mxu0 %v2207
    %v2209 = vand.u32 %v1722, 4294901760
    %v2210 = vsub.f32 %v1722, %v2209
    %v2211 = vand.u32 %v2210, 4294901760
    %v2212 = vsub.f32 %v2210, %v2211
    %v2213 = vand.u32 %v2212, 4294901760
    %2214 = vmatpush.msra.mxu0 %v2213
    %v2215 = vand.u32 %v1721, 4294901760
    %v2216 = vsub.f32 %v1721, %v2215
    %v2217 = vand.u32 %v2216, 4294901760
    %v2218 = vsub.f32 %v2216, %v2217
    %v2219 = vand.u32 %v2218, 4294901760
    %2220 = vmatpush.msra.mxu0 %v2219
    %v2221 = vand.u32 %v1720, 4294901760
    %v2222 = vsub.f32 %v1720, %v2221
    %v2223 = vand.u32 %v2222, 4294901760
    %v2224 = vsub.f32 %v2222, %v2223
    %v2225 = vand.u32 %v2224, 4294901760
    %2226 = vmatpush.msra.mxu0 %v2225
    %v2227 = vand.u32 %v2089, 4294901760
    %2228 = vmatmul.f32.gmra.mxu0 %v2227
    %v2229 = vpop.f32.mrf.mxu0
    %v2230 = vadd.f32 %v2129, %v2229
    %2231 = vdwg.mxu0
    %v2232 = vand.u32 %v1735, 4294901760
    %v2233 = vsub.f32 %v1735, %v2232
    %2234 = vmatpush.msra.mxu0 %v2233
    %v2235 = vand.u32 %v1734, 4294901760
    %v2236 = vsub.f32 %v1734, %v2235
    %2237 = vmatpush.msra.mxu0 %v2236
    %v2238 = vand.u32 %v1733, 4294901760
    %v2239 = vsub.f32 %v1733, %v2238
    %2240 = vmatpush.msra.mxu0 %v2239
    %v2241 = vand.u32 %v1732, 4294901760
    %v2242 = vsub.f32 %v1732, %v2241
    %2243 = vmatpush.msra.mxu0 %v2242
    %v2244 = vand.u32 %v1731, 4294901760
    %v2245 = vsub.f32 %v1731, %v2244
    %2246 = vmatpush.msra.mxu0 %v2245
    %v2247 = vand.u32 %v1730, 4294901760
    %v2248 = vsub.f32 %v1730, %v2247
    %2249 = vmatpush.msra.mxu0 %v2248
    %v2250 = vand.u32 %v1729, 4294901760
    %v2251 = vsub.f32 %v1729, %v2250
    %2252 = vmatpush.msra.mxu0 %v2251
    %v2253 = vand.u32 %v1728, 4294901760
    %v2254 = vsub.f32 %v1728, %v2253
    %2255 = vmatpush.msra.mxu0 %v2254
    %v2256 = vand.u32 %v1727, 4294901760
    %v2257 = vsub.f32 %v1727, %v2256
    %2258 = vmatpush.msra.mxu0 %v2257
    %v2259 = vand.u32 %v1726, 4294901760
    %v2260 = vsub.f32 %v1726, %v2259
    %2261 = vmatpush.msra.mxu0 %v2260
    %v2262 = vand.u32 %v1725, 4294901760
    %v2263 = vsub.f32 %v1725, %v2262
    %2264 = vmatpush.msra.mxu0 %v2263
    %v2265 = vand.u32 %v1724, 4294901760
    %v2266 = vsub.f32 %v1724, %v2265
    %2267 = vmatpush.msra.mxu0 %v2266
    %v2268 = vand.u32 %v1723, 4294901760
    %v2269 = vsub.f32 %v1723, %v2268
    %2270 = vmatpush.msra.mxu0 %v2269
    %v2271 = vand.u32 %v1722, 4294901760
    %v2272 = vsub.f32 %v1722, %v2271
    %2273 = vmatpush.msra.mxu0 %v2272
    %v2274 = vand.u32 %v1721, 4294901760
    %v2275 = vsub.f32 %v1721, %v2274
    %2276 = vmatpush.msra.mxu0 %v2275
    %v2277 = vand.u32 %v1720, 4294901760
    %v2278 = vsub.f32 %v1720, %v2277
    %2279 = vmatpush.msra.mxu0 %v2278
    %v2280 = vand.u32 %v2089, 4294901760
    %v2281 = vsub.f32 %v2089, %v2280
    %2282 = vmatmul.f32.gmra.mxu0 %v2281
    %v2283 = vpop.f32.mrf.mxu0
    %v2284 = vadd.f32 %v2230, %v2283
    %2285 = vdwg.mxu0
    %v2286 = vand.u32 %v1735, 4294901760
    %2287 = vmatpush.msra.mxu0 %v2286
    %v2288 = vand.u32 %v1734, 4294901760
    %2289 = vmatpush.msra.mxu0 %v2288
    %v2290 = vand.u32 %v1733, 4294901760
    %2291 = vmatpush.msra.mxu0 %v2290
    %v2292 = vand.u32 %v1732, 4294901760
    %2293 = vmatpush.msra.mxu0 %v2292
    %v2294 = vand.u32 %v1731, 4294901760
    %2295 = vmatpush.msra.mxu0 %v2294
    %v2296 = vand.u32 %v1730, 4294901760
    %2297 = vmatpush.msra.mxu0 %v2296
    %v2298 = vand.u32 %v1729, 4294901760
    %2299 = vmatpush.msra.mxu0 %v2298
    %v2300 = vand.u32 %v1728, 4294901760
    %2301 = vmatpush.msra.mxu0 %v2300
    %v2302 = vand.u32 %v1727, 4294901760
    %2303 = vmatpush.msra.mxu0 %v2302
    %v2304 = vand.u32 %v1726, 4294901760
    %2305 = vmatpush.msra.mxu0 %v2304
    %v2306 = vand.u32 %v1725, 4294901760
    %2307 = vmatpush.msra.mxu0 %v2306
    %v2308 = vand.u32 %v1724, 4294901760
    %2309 = vmatpush.msra.mxu0 %v2308
    %v2310 = vand.u32 %v1723, 4294901760
    %2311 = vmatpush.msra.mxu0 %v2310
    %v2312 = vand.u32 %v1722, 4294901760
    %2313 = vmatpush.msra.mxu0 %v2312
    %v2314 = vand.u32 %v1721, 4294901760
    %2315 = vmatpush.msra.mxu0 %v2314
    %v2316 = vand.u32 %v1720, 4294901760
    %2317 = vmatpush.msra.mxu0 %v2316
    %v2318 = vand.u32 %v2089, 4294901760
    %v2319 = vsub.f32 %v2089, %v2318
    %v2320 = vand.u32 %v2319, 4294901760
    %2321 = vmatmul.f32.gmra.mxu0 %v2320
    %v2322 = vpop.f32.mrf.mxu0
    %v2323 = vadd.f32 %v2284, %v2322
    %2324 = vdwg.mxu0
    %v2325 = vand.u32 %v1735, 4294901760
    %v2326 = vsub.f32 %v1735, %v2325
    %v2327 = vand.u32 %v2326, 4294901760
    %2328 = vmatpush.msra.mxu0 %v2327
    %v2329 = vand.u32 %v1734, 4294901760
    %v2330 = vsub.f32 %v1734, %v2329
    %v2331 = vand.u32 %v2330, 4294901760
    %2332 = vmatpush.msra.mxu0 %v2331
    %v2333 = vand.u32 %v1733, 4294901760
    %v2334 = vsub.f32 %v1733, %v2333
    %v2335 = vand.u32 %v2334, 4294901760
    %2336 = vmatpush.msra.mxu0 %v2335
    %v2337 = vand.u32 %v1732, 4294901760
    %v2338 = vsub.f32 %v1732, %v2337
    %v2339 = vand.u32 %v2338, 4294901760
    %2340 = vmatpush.msra.mxu0 %v2339
    %v2341 = vand.u32 %v1731, 4294901760
    %v2342 = vsub.f32 %v1731, %v2341
    %v2343 = vand.u32 %v2342, 4294901760
    %2344 = vmatpush.msra.mxu0 %v2343
    %v2345 = vand.u32 %v1730, 4294901760
    %v2346 = vsub.f32 %v1730, %v2345
    %v2347 = vand.u32 %v2346, 4294901760
    %2348 = vmatpush.msra.mxu0 %v2347
    %v2349 = vand.u32 %v1729, 4294901760
    %v2350 = vsub.f32 %v1729, %v2349
    %v2351 = vand.u32 %v2350, 4294901760
    %2352 = vmatpush.msra.mxu0 %v2351
    %v2353 = vand.u32 %v1728, 4294901760
    %v2354 = vsub.f32 %v1728, %v2353
    %v2355 = vand.u32 %v2354, 4294901760
    %2356 = vmatpush.msra.mxu0 %v2355
    %v2357 = vand.u32 %v1727, 4294901760
    %v2358 = vsub.f32 %v1727, %v2357
    %v2359 = vand.u32 %v2358, 4294901760
    %2360 = vmatpush.msra.mxu0 %v2359
    %v2361 = vand.u32 %v1726, 4294901760
    %v2362 = vsub.f32 %v1726, %v2361
    %v2363 = vand.u32 %v2362, 4294901760
    %2364 = vmatpush.msra.mxu0 %v2363
    %v2365 = vand.u32 %v1725, 4294901760
    %v2366 = vsub.f32 %v1725, %v2365
    %v2367 = vand.u32 %v2366, 4294901760
    %2368 = vmatpush.msra.mxu0 %v2367
    %v2369 = vand.u32 %v1724, 4294901760
    %v2370 = vsub.f32 %v1724, %v2369
    %v2371 = vand.u32 %v2370, 4294901760
    %2372 = vmatpush.msra.mxu0 %v2371
    %v2373 = vand.u32 %v1723, 4294901760
    %v2374 = vsub.f32 %v1723, %v2373
    %v2375 = vand.u32 %v2374, 4294901760
    %2376 = vmatpush.msra.mxu0 %v2375
    %v2377 = vand.u32 %v1722, 4294901760
    %v2378 = vsub.f32 %v1722, %v2377
    %v2379 = vand.u32 %v2378, 4294901760
    %2380 = vmatpush.msra.mxu0 %v2379
    %v2381 = vand.u32 %v1721, 4294901760
    %v2382 = vsub.f32 %v1721, %v2381
    %v2383 = vand.u32 %v2382, 4294901760
    %2384 = vmatpush.msra.mxu0 %v2383
    %v2385 = vand.u32 %v1720, 4294901760
    %v2386 = vsub.f32 %v1720, %v2385
    %v2387 = vand.u32 %v2386, 4294901760
    %2388 = vmatpush.msra.mxu0 %v2387
    %v2389 = vand.u32 %v2089, 4294901760
    %2390 = vmatmul.f32.gmra.mxu0 %v2389
    %v2391 = vpop.f32.mrf.mxu0
    %v2392 = vadd.f32 %v2323, %v2391
    %2393 = vdwg.mxu0
    %v2394 = vand.u32 %v1735, 4294901760
    %2395 = vmatpush.msra.mxu0 %v2394
    %v2396 = vand.u32 %v1734, 4294901760
    %2397 = vmatpush.msra.mxu0 %v2396
    %v2398 = vand.u32 %v1733, 4294901760
    %2399 = vmatpush.msra.mxu0 %v2398
    %v2400 = vand.u32 %v1732, 4294901760
    %2401 = vmatpush.msra.mxu0 %v2400
    %v2402 = vand.u32 %v1731, 4294901760
    %2403 = vmatpush.msra.mxu0 %v2402
    %v2404 = vand.u32 %v1730, 4294901760
    %2405 = vmatpush.msra.mxu0 %v2404
    %v2406 = vand.u32 %v1729, 4294901760
    %2407 = vmatpush.msra.mxu0 %v2406
    %v2408 = vand.u32 %v1728, 4294901760
    %2409 = vmatpush.msra.mxu0 %v2408
    %v2410 = vand.u32 %v1727, 4294901760
    %2411 = vmatpush.msra.mxu0 %v2410
    %v2412 = vand.u32 %v1726, 4294901760
    %2413 = vmatpush.msra.mxu0 %v2412
    %v2414 = vand.u32 %v1725, 4294901760
    %2415 = vmatpush.msra.mxu0 %v2414
    %v2416 = vand.u32 %v1724, 4294901760
    %2417 = vmatpush.msra.mxu0 %v2416
    %v2418 = vand.u32 %v1723, 4294901760
    %2419 = vmatpush.msra.mxu0 %v2418
    %v2420 = vand.u32 %v1722, 4294901760
    %2421 = vmatpush.msra.mxu0 %v2420
    %v2422 = vand.u32 %v1721, 4294901760
    %2423 = vmatpush.msra.mxu0 %v2422
    %v2424 = vand.u32 %v1720, 4294901760
    %2425 = vmatpush.msra.mxu0 %v2424
    %v2426 = vand.u32 %v2089, 4294901760
    %2427 = vmatmul.f32.gmra.mxu0 %v2426
    %v2428 = vpop.f32.mrf.mxu0
    %v2429 = vadd.f32 %v2392, %v2428
    %2430 = vdwg.mxu0
    %v2431 = vmul.f32 %v2075, 0.001953125
    %v2432 = vmul.f32 %v2429, 0.001953125
    %v2433 = vmul.f32 %v2431, %v2431
    %v2434 = vsub.f32 %v2432, %v2433
    %v2435 = vadd.f32 %v2434, 0.001
    %v2436 = vrsqrt.pop %v2435
    %v2437 = vmul.f32 %v2436, %v2435
    %v2438 = vmul.f32 %v2437, %v2436
    %v2439 = vmul.f32 0.5, %v2438
    %v2440 = vsub.f32 1.5, %v2439
    %v2441 = vmul.f32 %v2436, %v2440
    %vm2442 = vweird.f32 %v2435
    %vm2443 = vweird.f32 %v2436
    %vm2444 = vmor %vm2442, %vm2443
    %v2445 = vsel %vm2444, %v2436, %v2441
    %v2446 = vld [vmem:[%s10] sm:$0xff]
    %v2448 = vsel %vm1104, %v2431, 0
    %2450 = vmatpush.msra.mxu0 0.0
    %2451 = vmatpush.msra.mxu0 0.0
    %2452 = vmatpush.msra.mxu0 0.0
    %2453 = vmatpush.msra.mxu0 0.0
    %2454 = vmatpush.msra.mxu0 0.0
    %2455 = vmatpush.msra.mxu0 0.0
    %2456 = vmatpush.msra.mxu0 0.0
    %2457 = vmatpush.msra.mxu0 0.0
    %2458 = vmatpush.msra.mxu0 0.0
    %2459 = vmatpush.msra.mxu0 0.0
    %2460 = vmatpush.msra.mxu0 0.0
    %2461 = vmatpush.msra.mxu0 0.0
    %2462 = vmatpush.msra.mxu0 0.0
    %2463 = vmatpush.msra.mxu0 0.0
    %2464 = vmatpush.msra.mxu0 0.0
    %v2465 = vand.u32 %v2446, 4294901760
    %2466 = vmatpush.msra.mxu0 %v2465
    %v2467 = vand.u32 %v2448, 4294901760
    %v2468 = vsub.f32 %v2448, %v2467
    %v2469 = vand.u32 %v2468, 4294901760
    %v2470 = vsub.f32 %v2468, %v2469
    %v2471 = vand.u32 %v2470, 4294901760
    %2472 = vmatmul.f32.gmra.mxu0 %v2471
    %v2473 = vpop.f32.mrf.mxu0
    %v2474 = vadd.f32 0.0, %v2473
    %2475 = vdwg.mxu0
    %2476 = vmatpush.msra.mxu0 0.0
    %2477 = vmatpush.msra.mxu0 0.0
    %2478 = vmatpush.msra.mxu0 0.0
    %2479 = vmatpush.msra.mxu0 0.0
    %2480 = vmatpush.msra.mxu0 0.0
    %2481 = vmatpush.msra.mxu0 0.0
    %2482 = vmatpush.msra.mxu0 0.0
    %2483 = vmatpush.msra.mxu0 0.0
    %2484 = vmatpush.msra.mxu0 0.0
    %2485 = vmatpush.msra.mxu0 0.0
    %2486 = vmatpush.msra.mxu0 0.0
    %2487 = vmatpush.msra.mxu0 0.0
    %2488 = vmatpush.msra.mxu0 0.0
    %2489 = vmatpush.msra.mxu0 0.0
    %2490 = vmatpush.msra.mxu0 0.0
    %v2491 = vand.u32 %v2446, 4294901760
    %v2492 = vsub.f32 %v2446, %v2491
    %v2493 = vand.u32 %v2492, 4294901760
    %v2494 = vsub.f32 %v2492, %v2493
    %v2495 = vand.u32 %v2494, 4294901760
    %2496 = vmatpush.msra.mxu0 %v2495
    %v2497 = vand.u32 %v2448, 4294901760
    %2498 = vmatmul.f32.gmra.mxu0 %v2497
    %v2499 = vpop.f32.mrf.mxu0
    %v2500 = vadd.f32 %v2474, %v2499
    %2501 = vdwg.mxu0
    %2502 = vmatpush.msra.mxu0 0.0
    %2503 = vmatpush.msra.mxu0 0.0
    %2504 = vmatpush.msra.mxu0 0.0
    %2505 = vmatpush.msra.mxu0 0.0
    %2506 = vmatpush.msra.mxu0 0.0
    %2507 = vmatpush.msra.mxu0 0.0
    %2508 = vmatpush.msra.mxu0 0.0
    %2509 = vmatpush.msra.mxu0 0.0
    %2510 = vmatpush.msra.mxu0 0.0
    %2511 = vmatpush.msra.mxu0 0.0
    %2512 = vmatpush.msra.mxu0 0.0
    %2513 = vmatpush.msra.mxu0 0.0
    %2514 = vmatpush.msra.mxu0 0.0
    %2515 = vmatpush.msra.mxu0 0.0
    %2516 = vmatpush.msra.mxu0 0.0
    %v2517 = vand.u32 %v2446, 4294901760
    %v2518 = vsub.f32 %v2446, %v2517
    %2519 = vmatpush.msra.mxu0 %v2518
    %v2520 = vand.u32 %v2448, 4294901760
    %v2521 = vsub.f32 %v2448, %v2520
    %2522 = vmatmul.f32.gmra.mxu0 %v2521
    %v2523 = vpop.f32.mrf.mxu0
    %v2524 = vadd.f32 %v2500, %v2523
    %2525 = vdwg.mxu0
    %2526 = vmatpush.msra.mxu0 0.0
    %2527 = vmatpush.msra.mxu0 0.0
    %2528 = vmatpush.msra.mxu0 0.0
    %2529 = vmatpush.msra.mxu0 0.0
    %2530 = vmatpush.msra.mxu0 0.0
    %2531 = vmatpush.msra.mxu0 0.0
    %2532 = vmatpush.msra.mxu0 0.0
    %2533 = vmatpush.msra.mxu0 0.0
    %2534 = vmatpush.msra.mxu0 0.0
    %2535 = vmatpush.msra.mxu0 0.0
    %2536 = vmatpush.msra.mxu0 0.0
    %2537 = vmatpush.msra.mxu0 0.0
    %2538 = vmatpush.msra.mxu0 0.0
    %2539 = vmatpush.msra.mxu0 0.0
    %2540 = vmatpush.msra.mxu0 0.0
    %v2541 = vand.u32 %v2446, 4294901760
    %2542 = vmatpush.msra.mxu0 %v2541
    %v2543 = vand.u32 %v2448, 4294901760
    %v2544 = vsub.f32 %v2448, %v2543
    %v2545 = vand.u32 %v2544, 4294901760
    %2546 = vmatmul.f32.gmra.mxu0 %v2545
    %v2547 = vpop.f32.mrf.mxu0
    %v2548 = vadd.f32 %v2524, %v2547
    %2549 = vdwg.mxu0
    %2550 = vmatpush.msra.mxu0 0.0
    %2551 = vmatpush.msra.mxu0 0.0
    %2552 = vmatpush.msra.mxu0 0.0
    %2553 = vmatpush.msra.mxu0 0.0
    %2554 = vmatpush.msra.mxu0 0.0
    %2555 = vmatpush.msra.mxu0 0.0
    %2556 = vmatpush.msra.mxu0 0.0
    %2557 = vmatpush.msra.mxu0 0.0
    %2558 = vmatpush.msra.mxu0 0.0
    %2559 = vmatpush.msra.mxu0 0.0
    %2560 = vmatpush.msra.mxu0 0.0
    %2561 = vmatpush.msra.mxu0 0.0
    %2562 = vmatpush.msra.mxu0 0.0
    %2563 = vmatpush.msra.mxu0 0.0
    %2564 = vmatpush.msra.mxu0 0.0
    %v2565 = vand.u32 %v2446, 4294901760
    %v2566 = vsub.f32 %v2446, %v2565
    %v2567 = vand.u32 %v2566, 4294901760
    %2568 = vmatpush.msra.mxu0 %v2567
    %v2569 = vand.u32 %v2448, 4294901760
    %2570 = vmatmul.f32.gmra.mxu0 %v2569
    %v2571 = vpop.f32.mrf.mxu0
    %v2572 = vadd.f32 %v2548, %v2571
    %2573 = vdwg.mxu0
    %2574 = vmatpush.msra.mxu0 0.0
    %2575 = vmatpush.msra.mxu0 0.0
    %2576 = vmatpush.msra.mxu0 0.0
    %2577 = vmatpush.msra.mxu0 0.0
    %2578 = vmatpush.msra.mxu0 0.0
    %2579 = vmatpush.msra.mxu0 0.0
    %2580 = vmatpush.msra.mxu0 0.0
    %2581 = vmatpush.msra.mxu0 0.0
    %2582 = vmatpush.msra.mxu0 0.0
    %2583 = vmatpush.msra.mxu0 0.0
    %2584 = vmatpush.msra.mxu0 0.0
    %2585 = vmatpush.msra.mxu0 0.0
    %2586 = vmatpush.msra.mxu0 0.0
    %2587 = vmatpush.msra.mxu0 0.0
    %2588 = vmatpush.msra.mxu0 0.0
    %v2589 = vand.u32 %v2446, 4294901760
    %2590 = vmatpush.msra.mxu0 %v2589
    %v2591 = vand.u32 %v2448, 4294901760
    %2592 = vmatmul.f32.gmra.mxu0 %v2591
    %v2593 = vpop.f32.mrf.mxu0
    %v2594 = vadd.f32 %v2572, %v2593
    %2595 = vdwg.mxu0
    %v2597 = vsel %vm1104, %v2445, 0
    %2599 = vmatpush.msra.mxu0 0.0
    %2600 = vmatpush.msra.mxu0 0.0
    %2601 = vmatpush.msra.mxu0 0.0
    %2602 = vmatpush.msra.mxu0 0.0
    %2603 = vmatpush.msra.mxu0 0.0
    %2604 = vmatpush.msra.mxu0 0.0
    %2605 = vmatpush.msra.mxu0 0.0
    %2606 = vmatpush.msra.mxu0 0.0
    %2607 = vmatpush.msra.mxu0 0.0
    %2608 = vmatpush.msra.mxu0 0.0
    %2609 = vmatpush.msra.mxu0 0.0
    %2610 = vmatpush.msra.mxu0 0.0
    %2611 = vmatpush.msra.mxu0 0.0
    %2612 = vmatpush.msra.mxu0 0.0
    %2613 = vmatpush.msra.mxu0 0.0
    %v2614 = vand.u32 %v2446, 4294901760
    %2615 = vmatpush.msra.mxu0 %v2614
    %v2616 = vand.u32 %v2597, 4294901760
    %v2617 = vsub.f32 %v2597, %v2616
    %v2618 = vand.u32 %v2617, 4294901760
    %v2619 = vsub.f32 %v2617, %v2618
    %v2620 = vand.u32 %v2619, 4294901760
    %2621 = vmatmul.f32.gmra.mxu0 %v2620
    %v2622 = vpop.f32.mrf.mxu0
    %v2623 = vadd.f32 0.0, %v2622
    %2624 = vdwg.mxu0
    %2625 = vmatpush.msra.mxu0 0.0
    %2626 = vmatpush.msra.mxu0 0.0
    %2627 = vmatpush.msra.mxu0 0.0
    %2628 = vmatpush.msra.mxu0 0.0
    %2629 = vmatpush.msra.mxu0 0.0
    %2630 = vmatpush.msra.mxu0 0.0
    %2631 = vmatpush.msra.mxu0 0.0
    %2632 = vmatpush.msra.mxu0 0.0
    %2633 = vmatpush.msra.mxu0 0.0
    %2634 = vmatpush.msra.mxu0 0.0
    %2635 = vmatpush.msra.mxu0 0.0
    %2636 = vmatpush.msra.mxu0 0.0
    %2637 = vmatpush.msra.mxu0 0.0
    %2638 = vmatpush.msra.mxu0 0.0
    %2639 = vmatpush.msra.mxu0 0.0
    %v2640 = vand.u32 %v2446, 4294901760
    %v2641 = vsub.f32 %v2446, %v2640
    %v2642 = vand.u32 %v2641, 4294901760
    %v2643 = vsub.f32 %v2641, %v2642
    %v2644 = vand.u32 %v2643, 4294901760
    %2645 = vmatpush.msra.mxu0 %v2644
    %v2646 = vand.u32 %v2597, 4294901760
    %2647 = vmatmul.f32.gmra.mxu0 %v2646
    %v2648 = vpop.f32.mrf.mxu0
    %v2649 = vadd.f32 %v2623, %v2648
    %2650 = vdwg.mxu0
    %2651 = vmatpush.msra.mxu0 0.0
    %2652 = vmatpush.msra.mxu0 0.0
    %2653 = vmatpush.msra.mxu0 0.0
    %2654 = vmatpush.msra.mxu0 0.0
    %2655 = vmatpush.msra.mxu0 0.0
    %2656 = vmatpush.msra.mxu0 0.0
    %2657 = vmatpush.msra.mxu0 0.0
    %2658 = vmatpush.msra.mxu0 0.0
    %2659 = vmatpush.msra.mxu0 0.0
    %2660 = vmatpush.msra.mxu0 0.0
    %2661 = vmatpush.msra.mxu0 0.0
    %2662 = vmatpush.msra.mxu0 0.0
    %2663 = vmatpush.msra.mxu0 0.0
    %2664 = vmatpush.msra.mxu0 0.0
    %2665 = vmatpush.msra.mxu0 0.0
    %v2666 = vand.u32 %v2446, 4294901760
    %v2667 = vsub.f32 %v2446, %v2666
    %2668 = vmatpush.msra.mxu0 %v2667
    %v2669 = vand.u32 %v2597, 4294901760
    %v2670 = vsub.f32 %v2597, %v2669
    %2671 = vmatmul.f32.gmra.mxu0 %v2670
    %v2672 = vpop.f32.mrf.mxu0
    %v2673 = vadd.f32 %v2649, %v2672
    %2674 = vdwg.mxu0
    %2675 = vmatpush.msra.mxu0 0.0
    %2676 = vmatpush.msra.mxu0 0.0
    %2677 = vmatpush.msra.mxu0 0.0
    %2678 = vmatpush.msra.mxu0 0.0
    %2679 = vmatpush.msra.mxu0 0.0
    %2680 = vmatpush.msra.mxu0 0.0
    %2681 = vmatpush.msra.mxu0 0.0
    %2682 = vmatpush.msra.mxu0 0.0
    %2683 = vmatpush.msra.mxu0 0.0
    %2684 = vmatpush.msra.mxu0 0.0
    %2685 = vmatpush.msra.mxu0 0.0
    %2686 = vmatpush.msra.mxu0 0.0
    %2687 = vmatpush.msra.mxu0 0.0
    %2688 = vmatpush.msra.mxu0 0.0
    %2689 = vmatpush.msra.mxu0 0.0
    %v2690 = vand.u32 %v2446, 4294901760
    %2691 = vmatpush.msra.mxu0 %v2690
    %v2692 = vand.u32 %v2597, 4294901760
    %v2693 = vsub.f32 %v2597, %v2692
    %v2694 = vand.u32 %v2693, 4294901760
    %2695 = vmatmul.f32.gmra.mxu0 %v2694
    %v2696 = vpop.f32.mrf.mxu0
    %v2697 = vadd.f32 %v2673, %v2696
    %2698 = vdwg.mxu0
    %2699 = vmatpush.msra.mxu0 0.0
    %2700 = vmatpush.msra.mxu0 0.0
    %2701 = vmatpush.msra.mxu0 0.0
    %2702 = vmatpush.msra.mxu0 0.0
    %2703 = vmatpush.msra.mxu0 0.0
    %2704 = vmatpush.msra.mxu0 0.0
    %2705 = vmatpush.msra.mxu0 0.0
    %2706 = vmatpush.msra.mxu0 0.0
    %2707 = vmatpush.msra.mxu0 0.0
    %2708 = vmatpush.msra.mxu0 0.0
    %2709 = vmatpush.msra.mxu0 0.0
    %2710 = vmatpush.msra.mxu0 0.0
    %2711 = vmatpush.msra.mxu0 0.0
    %2712 = vmatpush.msra.mxu0 0.0
    %2713 = vmatpush.msra.mxu0 0.0
    %v2714 = vand.u32 %v2446, 4294901760
    %v2715 = vsub.f32 %v2446, %v2714
    %v2716 = vand.u32 %v2715, 4294901760
    %2717 = vmatpush.msra.mxu0 %v2716
    %v2718 = vand.u32 %v2597, 4294901760
    %2719 = vmatmul.f32.gmra.mxu0 %v2718
    %v2720 = vpop.f32.mrf.mxu0
    %v2721 = vadd.f32 %v2697, %v2720
    %2722 = vdwg.mxu0
    %2723 = vmatpush.msra.mxu0 0.0
    %2724 = vmatpush.msra.mxu0 0.0
    %2725 = vmatpush.msra.mxu0 0.0
    %2726 = vmatpush.msra.mxu0 0.0
    %2727 = vmatpush.msra.mxu0 0.0
    %2728 = vmatpush.msra.mxu0 0.0
    %2729 = vmatpush.msra.mxu0 0.0
    %2730 = vmatpush.msra.mxu0 0.0
    %2731 = vmatpush.msra.mxu0 0.0
    %2732 = vmatpush.msra.mxu0 0.0
    %2733 = vmatpush.msra.mxu0 0.0
    %2734 = vmatpush.msra.mxu0 0.0
    %2735 = vmatpush.msra.mxu0 0.0
    %2736 = vmatpush.msra.mxu0 0.0
    %2737 = vmatpush.msra.mxu0 0.0
    %v2738 = vand.u32 %v2446, 4294901760
    %2739 = vmatpush.msra.mxu0 %v2738
    %v2740 = vand.u32 %v2597, 4294901760
    %2741 = vmatmul.f32.gmra.mxu0 %v2740
    %v2742 = vpop.f32.mrf.mxu0
    %v2743 = vadd.f32 %v2721, %v2742
    %2744 = vdwg.mxu0
    %v2745 = vld [vmem:[%s7] sm:$0x1]
    %v2746 = vmul.f32 %v2745, %v2743
    %v2747 = vld [vmem:[%s8] sm:$0x1]
    %v2748 = vmul.f32 %v2594, %v2746
    %v2749 = vsub.f32 %v2747, %v2748
    %v2751 = vperm.slane %v2746, 0
    %v2753 = vmul.f32 %v1707, %v2751
    %v2754 = vmul.f32 %v1708, %v2751
    %v2755 = vmul.f32 %v1709, %v2751
    %v2756 = vmul.f32 %v1710, %v2751
    %v2758 = vperm.slane %v2749, 0
    %v2760 = vadd.f32 %v2753, %v2758
    %v2761 = vadd.f32 %v2754, %v2758
    %v2762 = vadd.f32 %v2755, %v2758
    %v2763 = vadd.f32 %v2756, %v2758
    %v2764 = vld [vmem:[%s0] sm:$0xff]
    %v2765 = vld [vmem:[%s0 + $0x8] sm:$0xff]
    %v2766 = vld [vmem:[%s0 + $0x10] sm:$0xff]
    %v2767 = vld [vmem:[%s0 + $0x18] sm:$0xff]
    %v2768 = vadd.f32 %v2760, %v2764
    %v2769 = vadd.f32 %v2761, %v2765
    %v2770 = vadd.f32 %v2762, %v2766
    %v2771 = vadd.f32 %v2763, %v2767
    %v2772 = vmax.f32 %v2768, 0.0
    %v2773 = vmax.f32 %v2769, 0.0
    %v2774 = vmax.f32 %v2770, 0.0
    %v2775 = vmax.f32 %v2771, 0.0
    %2776 = vst [vmem:[#allocation8] sm:$0xff] %v2772
    %2777 = vst [vmem:[#allocation8 + $0x8] sm:$0xff] %v2773
    %2778 = vst [vmem:[#allocation8 + $0x10] sm:$0xff] %v2774
    %2779 = vst [vmem:[#allocation8 + $0x18] sm:$0xff] %v2775
    // Predicated region
    $region54: #{tpu_custom_call.1} parent=1 // pred_check
      _
    $region55: #{tpu_custom_call.1} parent=1 // pred_check_branch
      %2781 = sbr.rel (0) target = $region57
    $region56: #{tpu_custom_call.1} parent=1 // pred_region
      %2783 = vsyncadd [#allocation5], 0
      %s2784 = sshll.u32 [#allocation8], 4
      %s2785 = int_to_ptr.vmem [resolvable:$true] %s2784
      %s2786 = sshll.u32 %s11, 4
      %s2787 = int_to_ptr.hbm [resolvable:$true] %s2786
      %2792 = dma.vmem_to_hbm [thread:$0]  %s2785, 512, %s2787, [#allocation5], 128, 128, 8
    $region57: #{tpu_custom_call.1} parent=1 // pred_fallthru
      _
    // Predicated region
    $region58: #{tpu_custom_call.1} parent=1 // pred_check
      _
    $region59: #{tpu_custom_call.1} parent=1 // pred_check_branch
      %2794 = sbr.rel (0) target = $region61
    $region60: #{tpu_custom_call.1} parent=1 // pred_region
      %2796 = dma.done [#allocation5], 512
    $region61: #{tpu_custom_call.1} parent=1 // pred_fallthru
      _
    %2797 = vsyncpa [#allocation4], 1
    %2798 = vsyncpa [#allocation7], 1
    %2799 = vsyncpa [#allocation5], 1

</llo_original>
